<compile_context>
chip_gen: v6e
topology: v6e:2x2x1
jax: 0.10.0
libtpu: 0.0.40
codegen_flags: <defaults>
</compile_context>

<pallas_src>
import jax
import jax.numpy as jnp
from jax.experimental import pallas as pl
from jax.experimental.pallas import tpu as pltpu

K = 5          # conv / pool kernel size
P = 2          # padding (= K // 2)


# ----------------------------------------------------------------------------
# Wrapper: one pallas_call for the whole network.
# ----------------------------------------------------------------------------
def conv_encoder_forward(x, params):
    """Full ConvEncoder forward in one fused Pallas TPU kernel.

    x: (B, in_channel, in_dim) float32 -> (B, latent_dim * 2) float32.
    """
    f32, bf16 = jnp.float32, jnp.bfloat16
    bsz, cin, l0 = x.shape
    l1 = (l0 - 1) // 2 + 1            # after first MaxPool1d(5, 2, 2)
    l2 = (l1 - 1) // 2 + 1            # after second MaxPool1d(5, 2, 2)
    n0, n1, n2 = bsz * l0, bsz * l1, bsz * l2
    c1 = params["conv1_w"].shape[0]   # 16
    c3 = params["conv3_w"].shape[0]   # 8
    hidden = params["fc1_w"].shape[1]
    out_dim = params["fc3_w"].shape[1]
    bh, bo = bsz * hidden, bsz * out_dim
    flat = c3 * l2
    assert params["fc1_w"].shape[0] == flat, (
        f"Flatten->fc1 contract broken: fc1 expects {params['fc1_w'].shape[0]} features, "
        f"conv stack produces {flat} (in_dim must be divisible by 4)")

    # ---------------- host-side packing (tiny, done once per call) ----------------
    def wcat(w):  # PyTorch (Cout, Cin, K) -> (Cout, K*Cin); column index = j*Cin + c
        co, ci, k = w.shape
        return jnp.transpose(w, (0, 2, 1)).reshape(co, k * ci)

    def conv_mask(L):
        # mask[j, n] = 1 iff tap j of lane n (= b*L + t) reads inside the same sample
        # (i.e. the zero-padding of the 'same' conv); source position is t + j - P.
        t = jnp.arange(bsz * L) % L
        return jnp.stack(
            [((t + j - P >= 0) & (t + j - P < L)) for j in range(K)]).astype(f32)

    def pool_mat(L_in):
        # 0/1 selection matrix (B*L_in, K*B*L_out); column j*(B*L_out) + b*L_out + t'
        # selects input lane b*L_in + 2*t' + j - P (all-zero column when out of range).
        L_out = (L_in - 1) // 2 + 1
        nin, nout = bsz * L_in, bsz * L_out
        q = jnp.arange(nin)[:, None]
        col = jnp.arange(K * nout)[None, :]
        j = col // nout
        r = col % nout
        b = r // L_out
        t = r % L_out
        src_t = 2 * t + j - P
        ok = (src_t >= 0) & (src_t < L_in)
        return ((q == b * L_in + src_t) & ok).astype(f32)

    def up16(v):
        return ((v + 15) // 16) * 16

    # Conv weights + pool selection matrices -> one bf16 slab (row offsets multiples of
    # 16 so bf16 sublane packing stays aligned).
    segs = [("c1", wcat(params["conv1_w"])),
            ("r1", wcat(params["res1_w"])),
            ("r2", wcat(params["res2_w"])),
            ("c2", wcat(params["conv2_w"])),
            ("c3", wcat(params["conv3_w"])),
            ("p1", pool_mat(l0)),
            ("p2", pool_mat(l1))]
    offs, row = {}, 0
    for name, mat in segs:
        offs[name] = row
        row = up16(row + mat.shape[0])
    op_cols = max(m.shape[1] for _, m in segs)
    op_slab = jnp.zeros((row, op_cols), f32)
    for name, mat in segs:
        op_slab = op_slab.at[offs[name]:offs[name] + mat.shape[0], :mat.shape[1]].set(mat)
    op_slab = op_slab.astype(bf16)

    # Conv biases -> one (rows, 1) f32 column slab.
    cb = jnp.zeros((up16(4 * c1 + c3), 1), f32)
    for i, nm in enumerate(["conv1_b", "res1_b", "res2_b", "conv2_b"]):
        cb = cb.at[i * c1:(i + 1) * c1, 0].set(params[nm])
    cb = cb.at[4 * c1:4 * c1 + c3, 0].set(params["conv3_b"])

    # Conv boundary masks for the 3 distinct lengths -> one f32 slab (rows 0 / 8 / 16).
    mk = jnp.zeros((24, n0), f32)
    mk = mk.at[0:K, :n0].set(conv_mask(l0))
    mk = mk.at[8:8 + K, :n1].set(conv_mask(l1))
    mk = mk.at[16:16 + K, :n2].set(conv_mask(l2))

    # MLP weights -> one bf16 slab:
    #   cols [0, bh)       : fc1 folded with the channel-major flatten (rows c*n2+b*l2+l)
    #   cols [bh, 2bh)     : blockdiag_B(fc2_w)
    #   cols [2bh, 2bh+bo) : blockdiag_B(fc3_w)
    w1r = params["fc1_w"].reshape(c3, l2, hidden)
    eye_b = jnp.eye(bsz, dtype=f32)
    f1stack = jnp.concatenate([jnp.kron(eye_b, w1r[c]) for c in range(c3)], axis=0)
    w2blk = jnp.kron(eye_b, params["fc2_w"])
    w3blk = jnp.kron(eye_b, params["fc3_w"])
    fw = jnp.zeros((max(c3 * n2, bh), 2 * bh + bo), f32)
    fw = fw.at[:c3 * n2, :bh].set(f1stack)
    fw = fw.at[:bh, bh:2 * bh].set(w2blk)
    fw = fw.at[:bh, 2 * bh:2 * bh + bo].set(w3blk)
    fw = fw.astype(bf16)

    # MLP biases, tiled per sample -> one f32 slab (rows 0 / 8 / 16).
    fb = jnp.zeros((24, max(bh, bo)), f32)
    fb = fb.at[0, :bh].set(jnp.tile(params["fc1_b"], bsz))
    fb = fb.at[8, :bh].set(jnp.tile(params["fc2_b"], bsz))
    fb = fb.at[16, :bo].set(jnp.tile(params["fc3_b"], bsz))

    # Input (B, Cin, L0) -> lane-packed (Cin, B*L0); sample b lives in lanes [b*L0,(b+1)*L0).
    xp = jnp.transpose(x, (1, 0, 2)).reshape(cin, n0).astype(f32)

    # ------------------------------ fused kernel ------------------------------
    def kernel(x_ref, op_ref, cb_ref, mk_ref, fw_ref, fb_ref, o_ref):
        def lane_roll(v, s):
            # static cyclic shift along lanes: out[:, l] = v[:, (l - s) % n]
            n = v.shape[1]
            s = s % n
            if s == 0:
                return v
            return jnp.concatenate([v[:, n - s:], v[:, :n - s]], axis=1)

        def conv_relu(h, w_bf, b_col, mask):
            # 'same' Conv1d + bias + ReLU as ONE bf16 MXU matmul: the K taps are lane
            # rotations * precomputed boundary masks, stacked into a (K*Cin, N) operand.
            parts = []
            for j in range(K):
                s = P - j
                hj = h if s == 0 else lane_roll(h, s) * mask[j:j + 1, :]
                parts.append(hj)
            big = jnp.concatenate(parts, axis=0).astype(jnp.bfloat16)
            out = jnp.dot(w_bf, big, preferred_element_type=jnp.float32)
            return jnp.maximum(out + b_col, 0.0)

        def maxpool(h, pmat_bf, nout):
            # MaxPool1d(5, 2, 2) as one selection matmul + 4 VPU maxes.
            # 0 stands in for PyTorch's -inf padding (inputs are >= 0, post-ReLU).
            taps = jnp.dot(h.astype(jnp.bfloat16), pmat_bf,
                           preferred_element_type=jnp.float32)
            out = taps[:, 0:nout]
            for j in range(1, K):
                out = jnp.maximum(out, taps[:, j * nout:(j + 1) * nout])
            return out

        m0 = mk_ref[0:K, 0:n0]
        m1 = mk_ref[8:8 + K, 0:n1]
        m2 = mk_ref[16:16 + K, 0:n2]

        x_p = x_ref[...]                                              # (Cin, B*L0)
        a = conv_relu(x_p, op_ref[offs["c1"]:offs["c1"] + c1, 0:K * cin],
                      cb_ref[0:c1, :], m0)                            # ConvBlock(in->16)
        r = conv_relu(a, op_ref[offs["r1"]:offs["r1"] + c1, 0:K * c1],
                      cb_ref[c1:2 * c1, :], m0)                       # Residual conv 1
        r = conv_relu(r, op_ref[offs["r2"]:offs["r2"] + c1, 0:K * c1],
                      cb_ref[2 * c1:3 * c1, :], m0)                   # Residual conv 2
        h = a + r                                                     # skip add
        h = maxpool(h, op_ref[offs["p1"]:offs["p1"] + n0, 0:K * n1], n1)
        h = conv_relu(h, op_ref[offs["c2"]:offs["c2"] + c1, 0:K * c1],
                      cb_ref[3 * c1:4 * c1, :], m1)                   # ConvBlock(16->16)
        h = maxpool(h, op_ref[offs["p2"]:offs["p2"] + n1, 0:K * n2], n2)
        h3 = conv_relu(h, op_ref[offs["c3"]:offs["c3"] + c3, 0:K * c1],
                       cb_ref[4 * c1:4 * c1 + c3, :], m2)             # ConvBlock(16->8)

        # Flatten (channel-major, per sample) + fc1: the flatten is folded into the
        # block-structured fc1 operator; per-channel partial products are independent
        # MXU pushes combined with a pairwise tree (no serial accumulator).
        # Dropout(p=0.01) layers: identity at inference.
        prods = [jnp.dot(h3[c:c + 1, :].astype(jnp.bfloat16),
                         fw_ref[c * n2:(c + 1) * n2, 0:bh],
                         preferred_element_type=jnp.float32)
                 for c in range(c3)]
        while len(prods) > 1:
            nxt = [prods[i] + prods[i + 1] for i in range(0, len(prods) - 1, 2)]
            if len(prods) % 2:
                nxt.append(prods[-1])
            prods = nxt
        h1 = prods[0] + fb_ref[0:1, 0:bh]                             # (1, B*hidden)

        h2 = jnp.dot(h1.astype(jnp.bfloat16), fw_ref[0:bh, bh:2 * bh],
                     preferred_element_type=jnp.float32) + fb_ref[8:9, 0:bh]
        h2 = jnp.where(h2 > 0, h2, jnp.exp(jnp.minimum(h2, 0.0)) - 1.0)   # ELU(alpha=1)
        out = jnp.dot(h2.astype(jnp.bfloat16), fw_ref[0:bh, 2 * bh:2 * bh + bo],
                      preferred_element_type=jnp.float32) + fb_ref[16:17, 0:bo]
        o_ref[...] = out.astype(o_ref.dtype)                          # single (1, B*out) store

    inputs = [xp, op_slab, cb, mk, fw, fb]
    in_specs = [pl.BlockSpec(a.shape, lambda i, _n=a.ndim: (0,) * _n) for a in inputs]

    out = pl.pallas_call(
        kernel,
        out_shape=jax.ShapeDtypeStruct((1, bo), x.dtype),
        grid=(1,),                       # whole batch in one step; batch lives in lanes
        in_specs=in_specs,
        out_specs=pl.BlockSpec((1, bo), lambda i: (0, 0)),
        compiler_params=pltpu.CompilerParams(dimension_semantics=("arbitrary",)),
    )(*inputs)
    return out.reshape(bsz, out_dim)


# ----------------------------------------------------------------------------
# Parameters (PyTorch-like shapes; Linear weights stored transposed as (in, out)).
# ----------------------------------------------------------------------------
def init_params(key, in_channel, in_dim, hidden_dim, latent_dim):
    ks = jax.random.split(key, 16)
    f32 = jnp.float32

    def w(k, shape, fan_in):
        return (jax.random.normal(k, shape, f32) / jnp.sqrt(float(fan_in))).astype(f32)

    def b(k, n):
        return (0.1 * jax.random.normal(k, (n,), f32)).astype(f32)

    return {
        "conv1_w": w(ks[0], (16, in_channel, 5), in_channel * 5), "conv1_b": b(ks[1], 16),
        "res1_w": w(ks[2], (16, 16, 5), 16 * 5), "res1_b": b(ks[3], 16),
        "res2_w": w(ks[4], (16, 16, 5), 16 * 5), "res2_b": b(ks[5], 16),
        "conv2_w": w(ks[6], (16, 16, 5), 16 * 5), "conv2_b": b(ks[7], 16),
        "conv3_w": w(ks[8], (8, 16, 5), 16 * 5), "conv3_b": b(ks[9], 8),
        "fc1_w": w(ks[10], (in_dim * 2, hidden_dim), in_dim * 2), "fc1_b": b(ks[11], hidden_dim),
        "fc2_w": w(ks[12], (hidden_dim, hidden_dim), hidden_dim), "fc2_b": b(ks[13], hidden_dim),
        "fc3_w": w(ks[14], (hidden_dim, latent_dim * 2), hidden_dim),
        "fc3_b": b(ks[15], latent_dim * 2),
    }


# ----------------------------------------------------------------------------
# Pure-JAX reference (same inferred semantics) for an in-script sanity check.
# ----------------------------------------------------------------------------
def _reference_forward(x, p):
    def conv(h, w, b):
        k = w.shape[2]
        pad = k // 2
        hp = jnp.pad(h, ((0, 0), (0, 0), (pad, pad)))
        cols = jnp.stack([hp[:, :, j:j + h.shape[2]] for j in range(k)], axis=3)
        out = jnp.einsum("bclk,ock->bol", cols, w) + b[None, :, None]
        return jax.nn.relu(out)

    def pool(h):
        _, _, l = h.shape
        lout = (l - 1) // 2 + 1
        hp = jnp.pad(h, ((0, 0), (0, 0), (2, 2)), constant_values=-jnp.inf)
        wins = jnp.stack([hp[:, :, j:j + 2 * (lout - 1) + 1:2] for j in range(5)], axis=3)
        return wins.max(axis=3)

    h = conv(x, p["conv1_w"], p["conv1_b"])
    r = conv(h, p["res1_w"], p["res1_b"])
    r = conv(r, p["res2_w"], p["res2_b"])
    h = h + r
    h = pool(h)
    h = conv(h, p["conv2_w"], p["conv2_b"])
    h = pool(h)
    h = conv(h, p["conv3_w"], p["conv3_b"])
    flat = h.reshape(h.shape[0], -1)
    h1 = flat @ p["fc1_w"] + p["fc1_b"]
    h2 = h1 @ p["fc2_w"] + p["fc2_b"]
    h2 = jnp.where(h2 > 0, h2, jnp.expm1(jnp.minimum(h2, 0.0)))
    return h2 @ p["fc3_w"] + p["fc3_b"]


if __name__ == "__main__":
    B, IN_CHANNEL, IN_DIM = 2, 4, 16
    HIDDEN, LATENT = 32, 2

    key = jax.random.PRNGKey(0)
    pkey, xkey = jax.random.split(key)
    params = init_params(pkey, IN_CHANNEL, IN_DIM, HIDDEN, LATENT)
    x = jax.random.normal(xkey, (B, IN_CHANNEL, IN_DIM), jnp.float32)

    out = conv_encoder_forward(x, params)
    out = jax.block_until_ready(out)

    assert out.shape == (B, LATENT * 2), out.shape
    assert out.dtype == jnp.float32

    # Sanity-check against the pure-JAX reference.  The kernel's MXU operands are bf16,
    # so the reference uses the same bf16-rounded weights; the remaining difference is
    # activation rounding at the matmul boundaries (well within the tolerance below).
    params_ref = {k: (v.astype(jnp.bfloat16).astype(jnp.float32) if k.endswith("_w") else v)
                  for k, v in params.items()}
    ref = _reference_forward(x, params_ref)
    assert jnp.allclose(out, ref, rtol=5e-2, atol=5e-2), float(jnp.max(jnp.abs(out - ref)))

    print("KERNEL_OK")
</pallas_src>

<mosaic_0001>
module attributes {stable_mosaic.version = 11 : i64} {
  func.func @kernel(%arg0: i32, %arg1: memref<4x32xf32, #tpu.memory_space<vmem>>, %arg2: memref<128x80xbf16, #tpu.memory_space<vmem>>, %arg3: memref<80x1xf32, #tpu.memory_space<vmem>>, %arg4: memref<24x32xf32, #tpu.memory_space<vmem>>, %arg5: memref<64x136xbf16, #tpu.memory_space<vmem>>, %arg6: memref<24x64xf32, #tpu.memory_space<vmem>>, %arg7: memref<1x8xf32, #tpu.memory_space<vmem>>) attributes {dimension_semantics = [#tpu.dimension_semantics<arbitrary>], iteration_bounds = array<i64: 1>, scalar_prefetch = 0 : i64, scratch_operands = 0 : i64, tpu.core_type = #tpu.core_type<tc>, window_params = [{pipeline_mode = #tpu.pipeline_mode<synchronous>, transform_indices = @transform_0, window_bounds = array<i64: 4, 32>}, {pipeline_mode = #tpu.pipeline_mode<synchronous>, transform_indices = @transform_1, window_bounds = array<i64: 128, 80>}, {pipeline_mode = #tpu.pipeline_mode<synchronous>, transform_indices = @transform_2, window_bounds = array<i64: 80, 1>}, {pipeline_mode = #tpu.pipeline_mode<synchronous>, transform_indices = @transform_3, window_bounds = array<i64: 24, 32>}, {pipeline_mode = #tpu.pipeline_mode<synchronous>, transform_indices = @transform_4, window_bounds = array<i64: 64, 136>}, {pipeline_mode = #tpu.pipeline_mode<synchronous>, transform_indices = @transform_5, window_bounds = array<i64: 24, 64>}, {pipeline_mode = #tpu.pipeline_mode<synchronous>, transform_indices = @transform_6, window_bounds = array<i64: 1, 8>}]} {
    %c0 = arith.constant 0 : index
    %c0_0 = arith.constant 0 : index
    %0 = vector.load %arg4[%c0, %c0_0] : memref<24x32xf32, #tpu.memory_space<vmem>>, vector<5x32xf32>
    %c8 = arith.constant 8 : index
    %c0_1 = arith.constant 0 : index
    %1 = vector.load %arg4[%c8, %c0_1] : memref<24x32xf32, #tpu.memory_space<vmem>>, vector<5x16xf32>
    %c16 = arith.constant 16 : index
    %c0_2 = arith.constant 0 : index
    %2 = vector.load %arg4[%c16, %c0_2] : memref<24x32xf32, #tpu.memory_space<vmem>>, vector<5x8xf32>
    %c0_3 = arith.constant 0 : index
    %c0_4 = arith.constant 0 : index
    %3 = vector.load %arg1[%c0_3, %c0_4] : memref<4x32xf32, #tpu.memory_space<vmem>>, vector<4x32xf32>
    %c0_5 = arith.constant 0 : index
    %c0_6 = arith.constant 0 : index
    %4 = vector.load %arg2[%c0_5, %c0_6] : memref<128x80xbf16, #tpu.memory_space<vmem>>, vector<16x20xbf16>
    %c0_7 = arith.constant 0 : index
    %c0_8 = arith.constant 0 : index
    %5 = vector.load %arg3[%c0_7, %c0_8] : memref<80x1xf32, #tpu.memory_space<vmem>>, vector<16x1xf32>
    %6 = vector.extract_strided_slice %3 {offsets = [0, 30], sizes = [4, 2], strides = [1, 1]} : vector<4x32xf32> to vector<4x2xf32>
    %7 = vector.extract_strided_slice %3 {offsets = [0, 0], sizes = [4, 30], strides = [1, 1]} : vector<4x32xf32> to vector<4x30xf32>
    %8 = tpu.concatenate %6, %7 in 1 : vector<4x2xf32>, vector<4x30xf32> -> vector<4x32xf32>
    %9 = vector.extract_strided_slice %0 {offsets = [0, 0], sizes = [1, 32], strides = [1, 1]} : vector<5x32xf32> to vector<1x32xf32>
    %10 = vector.broadcast %9 : vector<1x32xf32> to vector<4x32xf32>
    %11 = arith.mulf %8, %10 : vector<4x32xf32>
    %12 = vector.extract_strided_slice %3 {offsets = [0, 31], sizes = [4, 1], strides = [1, 1]} : vector<4x32xf32> to vector<4x1xf32>
    %13 = vector.extract_strided_slice %3 {offsets = [0, 0], sizes = [4, 31], strides = [1, 1]} : vector<4x32xf32> to vector<4x31xf32>
    %14 = tpu.concatenate %12, %13 in 1 : vector<4x1xf32>, vector<4x31xf32> -> vector<4x32xf32>
    %15 = vector.extract_strided_slice %0 {offsets = [1, 0], sizes = [1, 32], strides = [1, 1]} : vector<5x32xf32> to vector<1x32xf32>
    %16 = vector.broadcast %15 : vector<1x32xf32> to vector<4x32xf32>
    %17 = arith.mulf %14, %16 : vector<4x32xf32>
    %18 = vector.extract_strided_slice %3 {offsets = [0, 1], sizes = [4, 31], strides = [1, 1]} : vector<4x32xf32> to vector<4x31xf32>
    %19 = vector.extract_strided_slice %3 {offsets = [0, 0], sizes = [4, 1], strides = [1, 1]} : vector<4x32xf32> to vector<4x1xf32>
    %20 = tpu.concatenate %18, %19 in 1 : vector<4x31xf32>, vector<4x1xf32> -> vector<4x32xf32>
    %21 = vector.extract_strided_slice %0 {offsets = [3, 0], sizes = [1, 32], strides = [1, 1]} : vector<5x32xf32> to vector<1x32xf32>
    %22 = vector.broadcast %21 : vector<1x32xf32> to vector<4x32xf32>
    %23 = arith.mulf %20, %22 : vector<4x32xf32>
    %24 = vector.extract_strided_slice %3 {offsets = [0, 2], sizes = [4, 30], strides = [1, 1]} : vector<4x32xf32> to vector<4x30xf32>
    %25 = vector.extract_strided_slice %3 {offsets = [0, 0], sizes = [4, 2], strides = [1, 1]} : vector<4x32xf32> to vector<4x2xf32>
    %26 = tpu.concatenate %24, %25 in 1 : vector<4x30xf32>, vector<4x2xf32> -> vector<4x32xf32>
    %27 = vector.extract_strided_slice %0 {offsets = [4, 0], sizes = [1, 32], strides = [1, 1]} : vector<5x32xf32> to vector<1x32xf32>
    %28 = vector.broadcast %27 : vector<1x32xf32> to vector<4x32xf32>
    %29 = arith.mulf %26, %28 : vector<4x32xf32>
    %30 = tpu.concatenate %11, %17, %3, %23, %29 in 0 : vector<4x32xf32>, vector<4x32xf32>, vector<4x32xf32>, vector<4x32xf32>, vector<4x32xf32> -> vector<20x32xf32>
    %31 = arith.truncf %30 : vector<20x32xf32> to vector<20x32xbf16>
    %cst = arith.constant dense<0.000000e+00> : vector<16x32xf32>
    %32 = tpu.matmul %4, %31, %cst {dimension_numbers = #tpu.dot_dimension_numbers<[1], [0], [0], [1], [0, 0, 1, 1], [], []>} : vector<16x20xbf16>, vector<20x32xbf16>, vector<16x32xf32> -> vector<16x32xf32>
    %33 = vector.broadcast %5 : vector<16x1xf32> to vector<16x32xf32>
    %34 = arith.addf %32, %33 : vector<16x32xf32>
    %cst_9 = arith.constant 0.000000e+00 : f32
    %35 = vector.broadcast %cst_9 : f32 to vector<16x32xf32>
    %36 = arith.maximumf %34, %35 : vector<16x32xf32>
    %c16_10 = arith.constant 16 : index
    %c0_11 = arith.constant 0 : index
    %37 = vector.load %arg2[%c16_10, %c0_11] : memref<128x80xbf16, #tpu.memory_space<vmem>>, vector<16x80xbf16>
    %c16_12 = arith.constant 16 : index
    %c0_13 = arith.constant 0 : index
    %38 = vector.load %arg3[%c16_12, %c0_13] : memref<80x1xf32, #tpu.memory_space<vmem>>, vector<16x1xf32>
    %39 = vector.extract_strided_slice %36 {offsets = [0, 30], sizes = [16, 2], strides = [1, 1]} : vector<16x32xf32> to vector<16x2xf32>
    %40 = vector.extract_strided_slice %36 {offsets = [0, 0], sizes = [16, 30], strides = [1, 1]} : vector<16x32xf32> to vector<16x30xf32>
    %41 = tpu.concatenate %39, %40 in 1 : vector<16x2xf32>, vector<16x30xf32> -> vector<16x32xf32>
    %42 = vector.extract_strided_slice %0 {offsets = [0, 0], sizes = [1, 32], strides = [1, 1]} : vector<5x32xf32> to vector<1x32xf32>
    %43 = vector.broadcast %42 : vector<1x32xf32> to vector<16x32xf32>
    %44 = arith.mulf %41, %43 : vector<16x32xf32>
    %45 = vector.extract_strided_slice %36 {offsets = [0, 31], sizes = [16, 1], strides = [1, 1]} : vector<16x32xf32> to vector<16x1xf32>
    %46 = vector.extract_strided_slice %36 {offsets = [0, 0], sizes = [16, 31], strides = [1, 1]} : vector<16x32xf32> to vector<16x31xf32>
    %47 = tpu.concatenate %45, %46 in 1 : vector<16x1xf32>, vector<16x31xf32> -> vector<16x32xf32>
    %48 = vector.extract_strided_slice %0 {offsets = [1, 0], sizes = [1, 32], strides = [1, 1]} : vector<5x32xf32> to vector<1x32xf32>
    %49 = vector.broadcast %48 : vector<1x32xf32> to vector<16x32xf32>
    %50 = arith.mulf %47, %49 : vector<16x32xf32>
    %51 = vector.extract_strided_slice %36 {offsets = [0, 1], sizes = [16, 31], strides = [1, 1]} : vector<16x32xf32> to vector<16x31xf32>
    %52 = vector.extract_strided_slice %36 {offsets = [0, 0], sizes = [16, 1], strides = [1, 1]} : vector<16x32xf32> to vector<16x1xf32>
    %53 = tpu.concatenate %51, %52 in 1 : vector<16x31xf32>, vector<16x1xf32> -> vector<16x32xf32>
    %54 = vector.extract_strided_slice %0 {offsets = [3, 0], sizes = [1, 32], strides = [1, 1]} : vector<5x32xf32> to vector<1x32xf32>
    %55 = vector.broadcast %54 : vector<1x32xf32> to vector<16x32xf32>
    %56 = arith.mulf %53, %55 : vector<16x32xf32>
    %57 = vector.extract_strided_slice %36 {offsets = [0, 2], sizes = [16, 30], strides = [1, 1]} : vector<16x32xf32> to vector<16x30xf32>
    %58 = vector.extract_strided_slice %36 {offsets = [0, 0], sizes = [16, 2], strides = [1, 1]} : vector<16x32xf32> to vector<16x2xf32>
    %59 = tpu.concatenate %57, %58 in 1 : vector<16x30xf32>, vector<16x2xf32> -> vector<16x32xf32>
    %60 = vector.extract_strided_slice %0 {offsets = [4, 0], sizes = [1, 32], strides = [1, 1]} : vector<5x32xf32> to vector<1x32xf32>
    %61 = vector.broadcast %60 : vector<1x32xf32> to vector<16x32xf32>
    %62 = arith.mulf %59, %61 : vector<16x32xf32>
    %63 = tpu.concatenate %44, %50, %36, %56, %62 in 0 : vector<16x32xf32>, vector<16x32xf32>, vector<16x32xf32>, vector<16x32xf32>, vector<16x32xf32> -> vector<80x32xf32>
    %64 = arith.truncf %63 : vector<80x32xf32> to vector<80x32xbf16>
    %cst_14 = arith.constant dense<0.000000e+00> : vector<16x32xf32>
    %65 = tpu.matmul %37, %64, %cst_14 {dimension_numbers = #tpu.dot_dimension_numbers<[1], [0], [0], [1], [0, 0, 1, 1], [], []>} : vector<16x80xbf16>, vector<80x32xbf16>, vector<16x32xf32> -> vector<16x32xf32>
    %66 = vector.broadcast %38 : vector<16x1xf32> to vector<16x32xf32>
    %67 = arith.addf %65, %66 : vector<16x32xf32>
    %cst_15 = arith.constant 0.000000e+00 : f32
    %68 = vector.broadcast %cst_15 : f32 to vector<16x32xf32>
    %69 = arith.maximumf %67, %68 : vector<16x32xf32>
    %c32 = arith.constant 32 : index
    %c0_16 = arith.constant 0 : index
    %70 = vector.load %arg2[%c32, %c0_16] : memref<128x80xbf16, #tpu.memory_space<vmem>>, vector<16x80xbf16>
    %c32_17 = arith.constant 32 : index
    %c0_18 = arith.constant 0 : index
    %71 = vector.load %arg3[%c32_17, %c0_18] : memref<80x1xf32, #tpu.memory_space<vmem>>, vector<16x1xf32>
    %72 = vector.extract_strided_slice %69 {offsets = [0, 30], sizes = [16, 2], strides = [1, 1]} : vector<16x32xf32> to vector<16x2xf32>
    %73 = vector.extract_strided_slice %69 {offsets = [0, 0], sizes = [16, 30], strides = [1, 1]} : vector<16x32xf32> to vector<16x30xf32>
    %74 = tpu.concatenate %72, %73 in 1 : vector<16x2xf32>, vector<16x30xf32> -> vector<16x32xf32>
    %75 = vector.extract_strided_slice %0 {offsets = [0, 0], sizes = [1, 32], strides = [1, 1]} : vector<5x32xf32> to vector<1x32xf32>
    %76 = vector.broadcast %75 : vector<1x32xf32> to vector<16x32xf32>
    %77 = arith.mulf %74, %76 : vector<16x32xf32>
    %78 = vector.extract_strided_slice %69 {offsets = [0, 31], sizes = [16, 1], strides = [1, 1]} : vector<16x32xf32> to vector<16x1xf32>
    %79 = vector.extract_strided_slice %69 {offsets = [0, 0], sizes = [16, 31], strides = [1, 1]} : vector<16x32xf32> to vector<16x31xf32>
    %80 = tpu.concatenate %78, %79 in 1 : vector<16x1xf32>, vector<16x31xf32> -> vector<16x32xf32>
    %81 = vector.extract_strided_slice %0 {offsets = [1, 0], sizes = [1, 32], strides = [1, 1]} : vector<5x32xf32> to vector<1x32xf32>
    %82 = vector.broadcast %81 : vector<1x32xf32> to vector<16x32xf32>
    %83 = arith.mulf %80, %82 : vector<16x32xf32>
    %84 = vector.extract_strided_slice %69 {offsets = [0, 1], sizes = [16, 31], strides = [1, 1]} : vector<16x32xf32> to vector<16x31xf32>
    %85 = vector.extract_strided_slice %69 {offsets = [0, 0], sizes = [16, 1], strides = [1, 1]} : vector<16x32xf32> to vector<16x1xf32>
    %86 = tpu.concatenate %84, %85 in 1 : vector<16x31xf32>, vector<16x1xf32> -> vector<16x32xf32>
    %87 = vector.extract_strided_slice %0 {offsets = [3, 0], sizes = [1, 32], strides = [1, 1]} : vector<5x32xf32> to vector<1x32xf32>
    %88 = vector.broadcast %87 : vector<1x32xf32> to vector<16x32xf32>
    %89 = arith.mulf %86, %88 : vector<16x32xf32>
    %90 = vector.extract_strided_slice %69 {offsets = [0, 2], sizes = [16, 30], strides = [1, 1]} : vector<16x32xf32> to vector<16x30xf32>
    %91 = vector.extract_strided_slice %69 {offsets = [0, 0], sizes = [16, 2], strides = [1, 1]} : vector<16x32xf32> to vector<16x2xf32>
    %92 = tpu.concatenate %90, %91 in 1 : vector<16x30xf32>, vector<16x2xf32> -> vector<16x32xf32>
    %93 = vector.extract_strided_slice %0 {offsets = [4, 0], sizes = [1, 32], strides = [1, 1]} : vector<5x32xf32> to vector<1x32xf32>
    %94 = vector.broadcast %93 : vector<1x32xf32> to vector<16x32xf32>
    %95 = arith.mulf %92, %94 : vector<16x32xf32>
    %96 = tpu.concatenate %77, %83, %69, %89, %95 in 0 : vector<16x32xf32>, vector<16x32xf32>, vector<16x32xf32>, vector<16x32xf32>, vector<16x32xf32> -> vector<80x32xf32>
    %97 = arith.truncf %96 : vector<80x32xf32> to vector<80x32xbf16>
    %cst_19 = arith.constant dense<0.000000e+00> : vector<16x32xf32>
    %98 = tpu.matmul %70, %97, %cst_19 {dimension_numbers = #tpu.dot_dimension_numbers<[1], [0], [0], [1], [0, 0, 1, 1], [], []>} : vector<16x80xbf16>, vector<80x32xbf16>, vector<16x32xf32> -> vector<16x32xf32>
    %99 = vector.broadcast %71 : vector<16x1xf32> to vector<16x32xf32>
    %100 = arith.addf %98, %99 : vector<16x32xf32>
    %cst_20 = arith.constant 0.000000e+00 : f32
    %101 = vector.broadcast %cst_20 : f32 to vector<16x32xf32>
    %102 = arith.maximumf %100, %101 : vector<16x32xf32>
    %103 = arith.addf %36, %102 : vector<16x32xf32>
    %c80 = arith.constant 80 : index
    %c0_21 = arith.constant 0 : index
    %104 = vector.load %arg2[%c80, %c0_21] : memref<128x80xbf16, #tpu.memory_space<vmem>>, vector<32x80xbf16>
    %105 = arith.truncf %103 : vector<16x32xf32> to vector<16x32xbf16>
    %cst_22 = arith.constant dense<0.000000e+00> : vector<16x80xf32>
    %106 = tpu.matmul %105, %104, %cst_22 {dimension_numbers = #tpu.dot_dimension_numbers<[1], [0], [0], [1], [0, 0, 1, 1], [], []>} : vector<16x32xbf16>, vector<32x80xbf16>, vector<16x80xf32> -> vector<16x80xf32>
    %107 = vector.extract_strided_slice %106 {offsets = [0, 0], sizes = [16, 16], strides = [1, 1]} : vector<16x80xf32> to vector<16x16xf32>
    %108 = vector.extract_strided_slice %106 {offsets = [0, 16], sizes = [16, 16], strides = [1, 1]} : vector<16x80xf32> to vector<16x16xf32>
    %109 = arith.maximumf %107, %108 : vector<16x16xf32>
    %110 = vector.extract_strided_slice %106 {offsets = [0, 32], sizes = [16, 16], strides = [1, 1]} : vector<16x80xf32> to vector<16x16xf32>
    %111 = arith.maximumf %109, %110 : vector<16x16xf32>
    %112 = vector.extract_strided_slice %106 {offsets = [0, 48], sizes = [16, 16], strides = [1, 1]} : vector<16x80xf32> to vector<16x16xf32>
    %113 = arith.maximumf %111, %112 : vector<16x16xf32>
    %114 = vector.extract_strided_slice %106 {offsets = [0, 64], sizes = [16, 16], strides = [1, 1]} : vector<16x80xf32> to vector<16x16xf32>
    %115 = arith.maximumf %113, %114 : vector<16x16xf32>
    %c48 = arith.constant 48 : index
    %c0_23 = arith.constant 0 : index
    %116 = vector.load %arg2[%c48, %c0_23] : memref<128x80xbf16, #tpu.memory_space<vmem>>, vector<16x80xbf16>
    %c48_24 = arith.constant 48 : index
    %c0_25 = arith.constant 0 : index
    %117 = vector.load %arg3[%c48_24, %c0_25] : memref<80x1xf32, #tpu.memory_space<vmem>>, vector<16x1xf32>
    %118 = vector.extract_strided_slice %115 {offsets = [0, 14], sizes = [16, 2], strides = [1, 1]} : vector<16x16xf32> to vector<16x2xf32>
    %119 = vector.extract_strided_slice %115 {offsets = [0, 0], sizes = [16, 14], strides = [1, 1]} : vector<16x16xf32> to vector<16x14xf32>
    %120 = tpu.concatenate %118, %119 in 1 : vector<16x2xf32>, vector<16x14xf32> -> vector<16x16xf32>
    %121 = vector.extract_strided_slice %1 {offsets = [0, 0], sizes = [1, 16], strides = [1, 1]} : vector<5x16xf32> to vector<1x16xf32>
    %122 = vector.broadcast %121 : vector<1x16xf32> to vector<16x16xf32>
    %123 = arith.mulf %120, %122 : vector<16x16xf32>
    %124 = vector.extract_strided_slice %115 {offsets = [0, 15], sizes = [16, 1], strides = [1, 1]} : vector<16x16xf32> to vector<16x1xf32>
    %125 = vector.extract_strided_slice %115 {offsets = [0, 0], sizes = [16, 15], strides = [1, 1]} : vector<16x16xf32> to vector<16x15xf32>
    %126 = tpu.concatenate %124, %125 in 1 : vector<16x1xf32>, vector<16x15xf32> -> vector<16x16xf32>
    %127 = vector.extract_strided_slice %1 {offsets = [1, 0], sizes = [1, 16], strides = [1, 1]} : vector<5x16xf32> to vector<1x16xf32>
    %128 = vector.broadcast %127 : vector<1x16xf32> to vector<16x16xf32>
    %129 = arith.mulf %126, %128 : vector<16x16xf32>
    %130 = vector.extract_strided_slice %115 {offsets = [0, 1], sizes = [16, 15], strides = [1, 1]} : vector<16x16xf32> to vector<16x15xf32>
    %131 = vector.extract_strided_slice %115 {offsets = [0, 0], sizes = [16, 1], strides = [1, 1]} : vector<16x16xf32> to vector<16x1xf32>
    %132 = tpu.concatenate %130, %131 in 1 : vector<16x15xf32>, vector<16x1xf32> -> vector<16x16xf32>
    %133 = vector.extract_strided_slice %1 {offsets = [3, 0], sizes = [1, 16], strides = [1, 1]} : vector<5x16xf32> to vector<1x16xf32>
    %134 = vector.broadcast %133 : vector<1x16xf32> to vector<16x16xf32>
    %135 = arith.mulf %132, %134 : vector<16x16xf32>
    %136 = vector.extract_strided_slice %115 {offsets = [0, 2], sizes = [16, 14], strides = [1, 1]} : vector<16x16xf32> to vector<16x14xf32>
    %137 = vector.extract_strided_slice %115 {offsets = [0, 0], sizes = [16, 2], strides = [1, 1]} : vector<16x16xf32> to vector<16x2xf32>
    %138 = tpu.concatenate %136, %137 in 1 : vector<16x14xf32>, vector<16x2xf32> -> vector<16x16xf32>
    %139 = vector.extract_strided_slice %1 {offsets = [4, 0], sizes = [1, 16], strides = [1, 1]} : vector<5x16xf32> to vector<1x16xf32>
    %140 = vector.broadcast %139 : vector<1x16xf32> to vector<16x16xf32>
    %141 = arith.mulf %138, %140 : vector<16x16xf32>
    %142 = tpu.concatenate %123, %129, %115, %135, %141 in 0 : vector<16x16xf32>, vector<16x16xf32>, vector<16x16xf32>, vector<16x16xf32>, vector<16x16xf32> -> vector<80x16xf32>
    %143 = arith.truncf %142 : vector<80x16xf32> to vector<80x16xbf16>
    %cst_26 = arith.constant dense<0.000000e+00> : vector<16x16xf32>
    %144 = tpu.matmul %116, %143, %cst_26 {dimension_numbers = #tpu.dot_dimension_numbers<[1], [0], [0], [1], [0, 0, 1, 1], [], []>} : vector<16x80xbf16>, vector<80x16xbf16>, vector<16x16xf32> -> vector<16x16xf32>
    %145 = vector.broadcast %117 : vector<16x1xf32> to vector<16x16xf32>
    %146 = arith.addf %144, %145 : vector<16x16xf32>
    %cst_27 = arith.constant 0.000000e+00 : f32
    %147 = vector.broadcast %cst_27 : f32 to vector<16x16xf32>
    %148 = arith.maximumf %146, %147 : vector<16x16xf32>
    %c112 = arith.constant 112 : index
    %c0_28 = arith.constant 0 : index
    %149 = vector.load %arg2[%c112, %c0_28] : memref<128x80xbf16, #tpu.memory_space<vmem>>, vector<16x40xbf16>
    %150 = arith.truncf %148 : vector<16x16xf32> to vector<16x16xbf16>
    %cst_29 = arith.constant dense<0.000000e+00> : vector<16x40xf32>
    %151 = tpu.matmul %150, %149, %cst_29 {dimension_numbers = #tpu.dot_dimension_numbers<[1], [0], [0], [1], [0, 0, 1, 1], [], []>} : vector<16x16xbf16>, vector<16x40xbf16>, vector<16x40xf32> -> vector<16x40xf32>
    %152 = vector.extract_strided_slice %151 {offsets = [0, 0], sizes = [16, 8], strides = [1, 1]} : vector<16x40xf32> to vector<16x8xf32>
    %153 = vector.extract_strided_slice %151 {offsets = [0, 8], sizes = [16, 8], strides = [1, 1]} : vector<16x40xf32> to vector<16x8xf32>
    %154 = arith.maximumf %152, %153 : vector<16x8xf32>
    %155 = vector.extract_strided_slice %151 {offsets = [0, 16], sizes = [16, 8], strides = [1, 1]} : vector<16x40xf32> to vector<16x8xf32>
    %156 = arith.maximumf %154, %155 : vector<16x8xf32>
    %157 = vector.extract_strided_slice %151 {offsets = [0, 24], sizes = [16, 8], strides = [1, 1]} : vector<16x40xf32> to vector<16x8xf32>
    %158 = arith.maximumf %156, %157 : vector<16x8xf32>
    %159 = vector.extract_strided_slice %151 {offsets = [0, 32], sizes = [16, 8], strides = [1, 1]} : vector<16x40xf32> to vector<16x8xf32>
    %160 = arith.maximumf %158, %159 : vector<16x8xf32>
    %c64 = arith.constant 64 : index
    %c0_30 = arith.constant 0 : index
    %161 = vector.load %arg2[%c64, %c0_30] : memref<128x80xbf16, #tpu.memory_space<vmem>>, vector<8x80xbf16>
    %c64_31 = arith.constant 64 : index
    %c0_32 = arith.constant 0 : index
    %162 = vector.load %arg3[%c64_31, %c0_32] : memref<80x1xf32, #tpu.memory_space<vmem>>, vector<8x1xf32>
    %163 = vector.extract_strided_slice %160 {offsets = [0, 6], sizes = [16, 2], strides = [1, 1]} : vector<16x8xf32> to vector<16x2xf32>
    %164 = vector.extract_strided_slice %160 {offsets = [0, 0], sizes = [16, 6], strides = [1, 1]} : vector<16x8xf32> to vector<16x6xf32>
    %165 = tpu.concatenate %163, %164 in 1 : vector<16x2xf32>, vector<16x6xf32> -> vector<16x8xf32>
    %166 = vector.extract_strided_slice %2 {offsets = [0, 0], sizes = [1, 8], strides = [1, 1]} : vector<5x8xf32> to vector<1x8xf32>
    %167 = vector.broadcast %166 : vector<1x8xf32> to vector<16x8xf32>
    %168 = arith.mulf %165, %167 : vector<16x8xf32>
    %169 = vector.extract_strided_slice %160 {offsets = [0, 7], sizes = [16, 1], strides = [1, 1]} : vector<16x8xf32> to vector<16x1xf32>
    %170 = vector.extract_strided_slice %160 {offsets = [0, 0], sizes = [16, 7], strides = [1, 1]} : vector<16x8xf32> to vector<16x7xf32>
    %171 = tpu.concatenate %169, %170 in 1 : vector<16x1xf32>, vector<16x7xf32> -> vector<16x8xf32>
    %172 = vector.extract_strided_slice %2 {offsets = [1, 0], sizes = [1, 8], strides = [1, 1]} : vector<5x8xf32> to vector<1x8xf32>
    %173 = vector.broadcast %172 : vector<1x8xf32> to vector<16x8xf32>
    %174 = arith.mulf %171, %173 : vector<16x8xf32>
    %175 = vector.extract_strided_slice %160 {offsets = [0, 1], sizes = [16, 7], strides = [1, 1]} : vector<16x8xf32> to vector<16x7xf32>
    %176 = vector.extract_strided_slice %160 {offsets = [0, 0], sizes = [16, 1], strides = [1, 1]} : vector<16x8xf32> to vector<16x1xf32>
    %177 = tpu.concatenate %175, %176 in 1 : vector<16x7xf32>, vector<16x1xf32> -> vector<16x8xf32>
    %178 = vector.extract_strided_slice %2 {offsets = [3, 0], sizes = [1, 8], strides = [1, 1]} : vector<5x8xf32> to vector<1x8xf32>
    %179 = vector.broadcast %178 : vector<1x8xf32> to vector<16x8xf32>
    %180 = arith.mulf %177, %179 : vector<16x8xf32>
    %181 = vector.extract_strided_slice %160 {offsets = [0, 2], sizes = [16, 6], strides = [1, 1]} : vector<16x8xf32> to vector<16x6xf32>
    %182 = vector.extract_strided_slice %160 {offsets = [0, 0], sizes = [16, 2], strides = [1, 1]} : vector<16x8xf32> to vector<16x2xf32>
    %183 = tpu.concatenate %181, %182 in 1 : vector<16x6xf32>, vector<16x2xf32> -> vector<16x8xf32>
    %184 = vector.extract_strided_slice %2 {offsets = [4, 0], sizes = [1, 8], strides = [1, 1]} : vector<5x8xf32> to vector<1x8xf32>
    %185 = vector.broadcast %184 : vector<1x8xf32> to vector<16x8xf32>
    %186 = arith.mulf %183, %185 : vector<16x8xf32>
    %187 = tpu.concatenate %168, %174, %160, %180, %186 in 0 : vector<16x8xf32>, vector<16x8xf32>, vector<16x8xf32>, vector<16x8xf32>, vector<16x8xf32> -> vector<80x8xf32>
    %188 = arith.truncf %187 : vector<80x8xf32> to vector<80x8xbf16>
    %cst_33 = arith.constant dense<0.000000e+00> : vector<8x8xf32>
    %189 = tpu.matmul %161, %188, %cst_33 {dimension_numbers = #tpu.dot_dimension_numbers<[1], [0], [0], [1], [0, 0, 1, 1], [], []>} : vector<8x80xbf16>, vector<80x8xbf16>, vector<8x8xf32> -> vector<8x8xf32>
    %190 = vector.broadcast %162 : vector<8x1xf32> to vector<8x8xf32>
    %191 = arith.addf %189, %190 : vector<8x8xf32>
    %cst_34 = arith.constant 0.000000e+00 : f32
    %192 = vector.broadcast %cst_34 : f32 to vector<8x8xf32>
    %193 = arith.maximumf %191, %192 : vector<8x8xf32>
    %194 = vector.extract_strided_slice %193 {offsets = [0, 0], sizes = [1, 8], strides = [1, 1]} : vector<8x8xf32> to vector<1x8xf32>
    %195 = arith.truncf %194 : vector<1x8xf32> to vector<1x8xbf16>
    %c0_35 = arith.constant 0 : index
    %c0_36 = arith.constant 0 : index
    %196 = vector.load %arg5[%c0_35, %c0_36] : memref<64x136xbf16, #tpu.memory_space<vmem>>, vector<8x64xbf16>
    %cst_37 = arith.constant dense<0.000000e+00> : vector<1x64xf32>
    %197 = tpu.matmul %195, %196, %cst_37 {dimension_numbers = #tpu.dot_dimension_numbers<[1], [0], [0], [1], [0, 0, 1, 1], [], []>} : vector<1x8xbf16>, vector<8x64xbf16>, vector<1x64xf32> -> vector<1x64xf32>
    %198 = vector.extract_strided_slice %193 {offsets = [1, 0], sizes = [1, 8], strides = [1, 1]} : vector<8x8xf32> to vector<1x8xf32>
    %199 = arith.truncf %198 : vector<1x8xf32> to vector<1x8xbf16>
    %c8_38 = arith.constant 8 : index
    %c0_39 = arith.constant 0 : index
    %200 = vector.load %arg5[%c8_38, %c0_39] : memref<64x136xbf16, #tpu.memory_space<vmem>>, vector<8x64xbf16>
    %cst_40 = arith.constant dense<0.000000e+00> : vector<1x64xf32>
    %201 = tpu.matmul %199, %200, %cst_40 {dimension_numbers = #tpu.dot_dimension_numbers<[1], [0], [0], [1], [0, 0, 1, 1], [], []>} : vector<1x8xbf16>, vector<8x64xbf16>, vector<1x64xf32> -> vector<1x64xf32>
    %202 = vector.extract_strided_slice %193 {offsets = [2, 0], sizes = [1, 8], strides = [1, 1]} : vector<8x8xf32> to vector<1x8xf32>
    %203 = arith.truncf %202 : vector<1x8xf32> to vector<1x8xbf16>
    %c16_41 = arith.constant 16 : index
    %c0_42 = arith.constant 0 : index
    %204 = vector.load %arg5[%c16_41, %c0_42] : memref<64x136xbf16, #tpu.memory_space<vmem>>, vector<8x64xbf16>
    %cst_43 = arith.constant dense<0.000000e+00> : vector<1x64xf32>
    %205 = tpu.matmul %203, %204, %cst_43 {dimension_numbers = #tpu.dot_dimension_numbers<[1], [0], [0], [1], [0, 0, 1, 1], [], []>} : vector<1x8xbf16>, vector<8x64xbf16>, vector<1x64xf32> -> vector<1x64xf32>
    %206 = vector.extract_strided_slice %193 {offsets = [3, 0], sizes = [1, 8], strides = [1, 1]} : vector<8x8xf32> to vector<1x8xf32>
    %207 = arith.truncf %206 : vector<1x8xf32> to vector<1x8xbf16>
    %c24 = arith.constant 24 : index
    %c0_44 = arith.constant 0 : index
    %208 = vector.load %arg5[%c24, %c0_44] : memref<64x136xbf16, #tpu.memory_space<vmem>>, vector<8x64xbf16>
    %cst_45 = arith.constant dense<0.000000e+00> : vector<1x64xf32>
    %209 = tpu.matmul %207, %208, %cst_45 {dimension_numbers = #tpu.dot_dimension_numbers<[1], [0], [0], [1], [0, 0, 1, 1], [], []>} : vector<1x8xbf16>, vector<8x64xbf16>, vector<1x64xf32> -> vector<1x64xf32>
    %210 = vector.extract_strided_slice %193 {offsets = [4, 0], sizes = [1, 8], strides = [1, 1]} : vector<8x8xf32> to vector<1x8xf32>
    %211 = arith.truncf %210 : vector<1x8xf32> to vector<1x8xbf16>
    %c32_46 = arith.constant 32 : index
    %c0_47 = arith.constant 0 : index
    %212 = vector.load %arg5[%c32_46, %c0_47] : memref<64x136xbf16, #tpu.memory_space<vmem>>, vector<8x64xbf16>
    %cst_48 = arith.constant dense<0.000000e+00> : vector<1x64xf32>
    %213 = tpu.matmul %211, %212, %cst_48 {dimension_numbers = #tpu.dot_dimension_numbers<[1], [0], [0], [1], [0, 0, 1, 1], [], []>} : vector<1x8xbf16>, vector<8x64xbf16>, vector<1x64xf32> -> vector<1x64xf32>
    %214 = vector.extract_strided_slice %193 {offsets = [5, 0], sizes = [1, 8], strides = [1, 1]} : vector<8x8xf32> to vector<1x8xf32>
    %215 = arith.truncf %214 : vector<1x8xf32> to vector<1x8xbf16>
    %c40 = arith.constant 40 : index
    %c0_49 = arith.constant 0 : index
    %216 = vector.load %arg5[%c40, %c0_49] : memref<64x136xbf16, #tpu.memory_space<vmem>>, vector<8x64xbf16>
    %cst_50 = arith.constant dense<0.000000e+00> : vector<1x64xf32>
    %217 = tpu.matmul %215, %216, %cst_50 {dimension_numbers = #tpu.dot_dimension_numbers<[1], [0], [0], [1], [0, 0, 1, 1], [], []>} : vector<1x8xbf16>, vector<8x64xbf16>, vector<1x64xf32> -> vector<1x64xf32>
    %218 = vector.extract_strided_slice %193 {offsets = [6, 0], sizes = [1, 8], strides = [1, 1]} : vector<8x8xf32> to vector<1x8xf32>
    %219 = arith.truncf %218 : vector<1x8xf32> to vector<1x8xbf16>
    %c48_51 = arith.constant 48 : index
    %c0_52 = arith.constant 0 : index
    %220 = vector.load %arg5[%c48_51, %c0_52] : memref<64x136xbf16, #tpu.memory_space<vmem>>, vector<8x64xbf16>
    %cst_53 = arith.constant dense<0.000000e+00> : vector<1x64xf32>
    %221 = tpu.matmul %219, %220, %cst_53 {dimension_numbers = #tpu.dot_dimension_numbers<[1], [0], [0], [1], [0, 0, 1, 1], [], []>} : vector<1x8xbf16>, vector<8x64xbf16>, vector<1x64xf32> -> vector<1x64xf32>
    %222 = vector.extract_strided_slice %193 {offsets = [7, 0], sizes = [1, 8], strides = [1, 1]} : vector<8x8xf32> to vector<1x8xf32>
    %223 = arith.truncf %222 : vector<1x8xf32> to vector<1x8xbf16>
    %c56 = arith.constant 56 : index
    %c0_54 = arith.constant 0 : index
    %224 = vector.load %arg5[%c56, %c0_54] : memref<64x136xbf16, #tpu.memory_space<vmem>>, vector<8x64xbf16>
    %cst_55 = arith.constant dense<0.000000e+00> : vector<1x64xf32>
    %225 = tpu.matmul %223, %224, %cst_55 {dimension_numbers = #tpu.dot_dimension_numbers<[1], [0], [0], [1], [0, 0, 1, 1], [], []>} : vector<1x8xbf16>, vector<8x64xbf16>, vector<1x64xf32> -> vector<1x64xf32>
    %226 = arith.addf %197, %201 : vector<1x64xf32>
    %227 = arith.addf %205, %209 : vector<1x64xf32>
    %228 = arith.addf %213, %217 : vector<1x64xf32>
    %229 = arith.addf %221, %225 : vector<1x64xf32>
    %230 = arith.addf %226, %227 : vector<1x64xf32>
    %231 = arith.addf %228, %229 : vector<1x64xf32>
    %232 = arith.addf %230, %231 : vector<1x64xf32>
    %c0_56 = arith.constant 0 : index
    %c0_57 = arith.constant 0 : index
    %233 = vector.load %arg6[%c0_56, %c0_57] : memref<24x64xf32, #tpu.memory_space<vmem>>, vector<1x64xf32>
    %234 = arith.addf %232, %233 : vector<1x64xf32>
    %235 = arith.truncf %234 : vector<1x64xf32> to vector<1x64xbf16>
    %c0_58 = arith.constant 0 : index
    %c64_59 = arith.constant 64 : index
    %236 = vector.load %arg5[%c0_58, %c64_59] : memref<64x136xbf16, #tpu.memory_space<vmem>>, vector<64x64xbf16>
    %cst_60 = arith.constant dense<0.000000e+00> : vector<1x64xf32>
    %237 = tpu.matmul %235, %236, %cst_60 {dimension_numbers = #tpu.dot_dimension_numbers<[1], [0], [0], [1], [0, 0, 1, 1], [], []>} : vector<1x64xbf16>, vector<64x64xbf16>, vector<1x64xf32> -> vector<1x64xf32>
    %c8_61 = arith.constant 8 : index
    %c0_62 = arith.constant 0 : index
    %238 = vector.load %arg6[%c8_61, %c0_62] : memref<24x64xf32, #tpu.memory_space<vmem>>, vector<1x64xf32>
    %239 = arith.addf %237, %238 : vector<1x64xf32>
    %cst_63 = arith.constant 0.000000e+00 : f32
    %240 = vector.broadcast %cst_63 : f32 to vector<1x64xf32>
    %241 = arith.cmpf ogt, %239, %240 : vector<1x64xf32>
    %cst_64 = arith.constant 0.000000e+00 : f32
    %242 = vector.broadcast %cst_64 : f32 to vector<1x64xf32>
    %243 = arith.minimumf %239, %242 : vector<1x64xf32>
    %244 = math.exp %243 : vector<1x64xf32>
    %cst_65 = arith.constant 1.000000e+00 : f32
    %245 = vector.broadcast %cst_65 : f32 to vector<1x64xf32>
    %246 = arith.subf %244, %245 : vector<1x64xf32>
    %247 = arith.select %241, %239, %246 : vector<1x64xi1>, vector<1x64xf32>
    %248 = arith.truncf %247 : vector<1x64xf32> to vector<1x64xbf16>
    %c0_66 = arith.constant 0 : index
    %c128 = arith.constant 128 : index
    %249 = vector.load %arg5[%c0_66, %c128] : memref<64x136xbf16, #tpu.memory_space<vmem>>, vector<64x8xbf16>
    %cst_67 = arith.constant dense<0.000000e+00> : vector<1x8xf32>
    %250 = tpu.matmul %248, %249, %cst_67 {dimension_numbers = #tpu.dot_dimension_numbers<[1], [0], [0], [1], [0, 0, 1, 1], [], []>} : vector<1x64xbf16>, vector<64x8xbf16>, vector<1x8xf32> -> vector<1x8xf32>
    %c16_68 = arith.constant 16 : index
    %c0_69 = arith.constant 0 : index
    %251 = vector.load %arg6[%c16_68, %c0_69] : memref<24x64xf32, #tpu.memory_space<vmem>>, vector<1x8xf32>
    %252 = arith.addf %250, %251 : vector<1x8xf32>
    %c0_70 = arith.constant 0 : index
    %c0_71 = arith.constant 0 : index
    %253 = vector.load %arg7[%c0_70, %c0_71] : memref<1x8xf32, #tpu.memory_space<vmem>>, vector<1x8xf32>
    tpu.vector_store %arg7[%c0_70, %c0_71], %252 {strides = array<i32>} : memref<1x8xf32, #tpu.memory_space<vmem>>, vector<1x8xf32>,
    return
  }
  func.func @transform_0(%arg0: i32) -> (i32, i32) {
    %c0_i32 = arith.constant 0 : i32
    %c0_i32_0 = arith.constant 0 : i32
    %c0_i32_1 = arith.constant 0 : i32
    return %c0_i32, %c0_i32_0 : i32, i32
  }
  func.func @transform_1(%arg0: i32) -> (i32, i32) {
    %c0_i32 = arith.constant 0 : i32
    %c0_i32_0 = arith.constant 0 : i32
    %c0_i32_1 = arith.constant 0 : i32
    return %c0_i32, %c0_i32_0 : i32, i32
  }
  func.func @transform_2(%arg0: i32) -> (i32, i32) {
    %c0_i32 = arith.constant 0 : i32
    %c0_i32_0 = arith.constant 0 : i32
    %c0_i32_1 = arith.constant 0 : i32
    return %c0_i32, %c0_i32_0 : i32, i32
  }
  func.func @transform_3(%arg0: i32) -> (i32, i32) {
    %c0_i32 = arith.constant 0 : i32
    %c0_i32_0 = arith.constant 0 : i32
    %c0_i32_1 = arith.constant 0 : i32
    return %c0_i32, %c0_i32_0 : i32, i32
  }
  func.func @transform_4(%arg0: i32) -> (i32, i32) {
    %c0_i32 = arith.constant 0 : i32
    %c0_i32_0 = arith.constant 0 : i32
    %c0_i32_1 = arith.constant 0 : i32
    return %c0_i32, %c0_i32_0 : i32, i32
  }
  func.func @transform_5(%arg0: i32) -> (i32, i32) {
    %c0_i32 = arith.constant 0 : i32
    %c0_i32_0 = arith.constant 0 : i32
    %c0_i32_1 = arith.constant 0 : i32
    return %c0_i32, %c0_i32_0 : i32, i32
  }
  func.func @transform_6(%arg0: i32) -> (i32, i32) {
    %c0_i32 = arith.constant 0 : i32
    %c0_i32_0 = arith.constant 0 : i32
    %c0_i32_1 = arith.constant 0 : i32
    return %c0_i32, %c0_i32_0 : i32, i32
  }
}

</mosaic_0001>

<llo_original>
// kernel: tpu_custom_call.1
$region0: #{tpu_custom_call.1}
  #allocation0 [shape = 'u32[]', space=smem, size = 0x4, offset = 0x4, fixed_abs, tag = 'smem constant byte address 0x4 - core index']
  #allocation1 [shape = 'u32[144,128]{1,0:T(1,128)}', space=vmem, size = 0x12000, scoped, tag = 'internal scratch']
  %s0 = inlined_call_operand.vmem [shape: f32[4,32], index: 0, kind: input, shape index: {}]
  %s1 = inlined_call_operand.vmem [shape: bf16[128,80], index: 1, kind: input, shape index: {}]
  %s2 = inlined_call_operand.vmem [shape: f32[80,1], index: 2, kind: input, shape index: {}]
  %s3 = inlined_call_operand.vmem [shape: f32[24,32], index: 3, kind: input, shape index: {}]
  %s4 = inlined_call_operand.vmem [shape: bf16[64,136], index: 4, kind: input, shape index: {}]
  %s5 = inlined_call_operand.vmem [shape: f32[24,64], index: 5, kind: input, shape index: {}]
  %s6 = inlined_call_operand.hbm [shape: f32[1,8], index: 6, kind: output, shape index: {}]
  %s7 = sld [smem:[#allocation0]]
  $region34: #{tpu_custom_call.1} parent=0
    _
  %s9 = ssub.s32 1, %s7
  %s10 = scalar_select 0, %s9, %s7
  $region1: #{tpu_custom_call.1} parent=0
    #allocation2 [shape = 'u8[512]{0}', space=vmem, size = 0x400, scoped, tag = 'output window, operand 0, single buffered']
    #allocation3 [shape = 's32[1]{0}', space=sflag, size = 0x4, scoped, tag = 'scoped memory for tpu_custom_call.1']
    %11 = vsyncpa [#allocation3], 0
    // Predicated region
    $region2: #{tpu_custom_call.1} parent=1 // pred_check
      _
    $region3: #{tpu_custom_call.1} parent=1 // pred_check_branch
      %13 = sbr.rel (0) target = $region5
    $region4: #{tpu_custom_call.1} parent=1 // pred_region
      _
    $region5: #{tpu_custom_call.1} parent=1 // pred_fallthru
      _
    // Predicated region
    $region6: #{tpu_custom_call.1} parent=1 // pred_check
      _
    $region7: #{tpu_custom_call.1} parent=1 // pred_check_branch
      %15 = sbr.rel (0) target = $region9
    $region8: #{tpu_custom_call.1} parent=1 // pred_region
      _
    $region9: #{tpu_custom_call.1} parent=1 // pred_fallthru
      _
    // Predicated region
    $region10: #{tpu_custom_call.1} parent=1 // pred_check
      _
    $region11: #{tpu_custom_call.1} parent=1 // pred_check_branch
      %17 = sbr.rel (0) target = $region13
    $region12: #{tpu_custom_call.1} parent=1 // pred_region
      _
    $region13: #{tpu_custom_call.1} parent=1 // pred_fallthru
      _
    // Predicated region
    $region14: #{tpu_custom_call.1} parent=1 // pred_check
      _
    $region15: #{tpu_custom_call.1} parent=1 // pred_check_branch
      %19 = sbr.rel (0) target = $region17
    $region16: #{tpu_custom_call.1} parent=1 // pred_region
      _
    $region17: #{tpu_custom_call.1} parent=1 // pred_fallthru
      _
    // Predicated region
    $region18: #{tpu_custom_call.1} parent=1 // pred_check
      _
    $region19: #{tpu_custom_call.1} parent=1 // pred_check_branch
      %21 = sbr.rel (0) target = $region21
    $region20: #{tpu_custom_call.1} parent=1 // pred_region
      _
    $region21: #{tpu_custom_call.1} parent=1 // pred_fallthru
      _
    // Predicated region
    $region22: #{tpu_custom_call.1} parent=1 // pred_check
      _
    $region23: #{tpu_custom_call.1} parent=1 // pred_check_branch
      %23 = sbr.rel (0) target = $region25
    $region24: #{tpu_custom_call.1} parent=1 // pred_region
      _
    $region25: #{tpu_custom_call.1} parent=1 // pred_fallthru
      _
    %v25 = vld [vmem:[%s3] sm:$0x1f]
    %v26 = vld [vmem:[%s3 + $0x8] sm:$0x1f]
    %v27 = vld [vmem:[%s3 + $0x10] sm:$0x1f]
    %v28 = vld [vmem:[%s0] sm:$0xf]
    %v29 = vld [vmem:[%s1] sm:$0xf]
    %v30 = vld [vmem:[%s1 + $0x4] sm:$0xf]
    %v31 = vld [vmem:[%s2] sm:$0xff]
    %v32 = vld [vmem:[%s2 + $0x8] sm:$0xff]
    %34 = vrot.lane.b32.xlu0 %v28, 98
    %v35 = vpop.permute.xlu0 %34
    %37 = vrot.lane.b32.xlu0 %v28, 2
    %v38 = vpop.permute.xlu0 %37
    %vm40 = vcmask 15360
    %v41 = vsel %vm40, %v35, %v38
    %v42 = vlaneseq
    %v43 = vshrl.u32 %v42, 7
    %v44 = vsub.s32 0, %v43
    %v45 = vrot.slane %v25, %v44
    %v46 = vmul.f32 %v41, %v45
    %47 = vrot.lane.b32.xlu0 %v28, 97
    %v48 = vpop.permute.xlu0 %47
    %50 = vrot.lane.b32.xlu0 %v28, 1
    %v51 = vpop.permute.xlu0 %50
    %vm53 = vcmask 7168
    %v54 = vsel %vm53, %v48, %v51
    %v55 = vlaneseq
    %v56 = vshrl.u32 %v55, 7
    %v57 = vsub.s32 1, %v56
    %v58 = vrot.slane %v25, %v57
    %v59 = vmul.f32 %v54, %v58
    %60 = vrot.lane.b32.xlu0 %v28, 127
    %v61 = vpop.permute.xlu0 %60
    %63 = vrot.lane.b32.xlu0 %v28, 31
    %v64 = vpop.permute.xlu0 %63
    %vm66 = vcmask 252928
    %v67 = vsel %vm66, %v61, %v64
    %v68 = vlaneseq
    %v69 = vshrl.u32 %v68, 7
    %v70 = vsub.s32 3, %v69
    %v71 = vrot.slane %v25, %v70
    %v72 = vmul.f32 %v67, %v71
    %73 = vrot.lane.b32.xlu0 %v28, 126
    %v74 = vpop.permute.xlu0 %73
    %76 = vrot.lane.b32.xlu0 %v28, 30
    %v77 = vpop.permute.xlu0 %76
    %vm79 = vcmask 244736
    %v80 = vsel %vm79, %v74, %v77
    %v81 = vlaneseq
    %v82 = vshrl.u32 %v81, 7
    %v83 = vsub.s32 4, %v82
    %v84 = vrot.slane %v25, %v83
    %v85 = vmul.f32 %v80, %v84
    %v87 = vrot.slane %v59, 4
    %v90 = vrot.slane %v72, 4
    %vm92 = vcmask 1043456
    %v93 = vsel %vm92, %v46, %v87
    %v94 = vsel %vm92, %v28, %v90
    %v95 = vpack.c.bf16 %v94, %v93
    %v96 = vpack.c.bf16 %v85, %v85
    %98 = vset.pattern.permute.xlu0 0
    %99 = vperm.xlu0 %98, %v31
    %v100 = vpop.permute.xlu0 %99
    %103 = vset.pattern.permute.xlu0 0
    %104 = vperm.xlu0 %103, %v32
    %v105 = vpop.permute.xlu0 %104
    %v109 = vunpack.c.l.b16 %v29
    %v110 = vunpack.c.l.b16 %v30
    %v111 = vpack.c.b16 %v110, %v109
    %vm112 = vcmask 162816
    %v114 = vsel %vm112, %v111, 0
    %vm116 = vcmask 1041408
    %v118 = vsel %vm116, %v96, 0
    %120 = vmatprep.subr.bf16.mxu0 0
    %121 = vmatpush1.bf16.msra.mxu0 0
    %122 = vmatprep.subr.bf16.mxu0 0
    %123 = vmatpush1.bf16.msra.mxu0 0
    %124 = vmatprep.subr.bf16.mxu0 0
    %125 = vmatpush1.bf16.msra.mxu0 0
    %126 = vmatprep.subr.bf16.mxu0 0
    %127 = vmatpush1.bf16.msra.mxu0 0
    %128 = vmatprep.subr.bf16.mxu0 0
    %129 = vmatpush1.bf16.msra.mxu0 0
    %130 = vmatprep.subr.bf16.mxu0 0
    %131 = vmatpush1.bf16.msra.mxu0 0
    %132 = vmatprep.subr.bf16.mxu0 0
    %133 = vmatpush1.bf16.msra.mxu0 %v118
    %134 = vmatprep.subr.bf16.mxu0 0
    %135 = vmatpush1.bf16.msra.mxu0 %v95
    %136 = vmatprep.subr.bf16.mxu0 0
    %137 = vmatpush2.bf16.msra.mxu0 0
    %138 = vmatprep.subr.bf16.mxu0 0
    %139 = vmatpush2.bf16.msra.mxu0 0
    %140 = vmatprep.subr.bf16.mxu0 0
    %141 = vmatpush2.bf16.msra.mxu0 0
    %142 = vmatprep.subr.bf16.mxu0 0
    %143 = vmatpush2.bf16.msra.mxu0 0
    %144 = vmatprep.subr.bf16.mxu0 0
    %145 = vmatpush2.bf16.msra.mxu0 0
    %146 = vmatprep.subr.bf16.mxu0 0
    %147 = vmatpush2.bf16.msra.mxu0 0
    %148 = vmatprep.subr.bf16.mxu0 0
    %149 = vmatpush2.bf16.msra.mxu0 0
    %150 = vmatprep.subr.bf16.mxu0 0
    %151 = vmatpush2.bf16.msra.mxu0 0
    %152 = vmatprep.mubr.bf16.mxu0 0
    %153 = vmatmul.mubr.bf16.gmra.mxu0 %v114
    %v154 = vpop.f32.mrf.mxu0
    %v155 = vadd.f32 %v100, %v154
    %v156 = vpop.f32.mrf.mxu0
    %v157 = vpop.f32.mrf.mxu0
    %v158 = vadd.f32 %v105, %v157
    %v159 = vpop.f32.mrf.mxu0
    %160 = vdwg.mxu0
    %v161 = vmax.f32 %v155, 0.0
    %v162 = vmax.f32 %v158, 0.0
    %v163 = vld [vmem:[%s1 + $0x8] sm:$0xf]
    %v164 = vld [vmem:[%s1 + $0xc] sm:$0xf]
    %v165 = vld [vmem:[%s2 + $0x10] sm:$0xff]
    %v166 = vld [vmem:[%s2 + $0x18] sm:$0xff]
    %169 = vrot.lane.b32.xlu0 %v161, 98
    %v170 = vpop.permute.xlu0 %169
    %171 = vrot.lane.b32.xlu0 %v162, 98
    %v172 = vpop.permute.xlu0 %171
    %175 = vrot.lane.b32.xlu0 %v161, 2
    %v176 = vpop.permute.xlu0 %175
    %177 = vrot.lane.b32.xlu0 %v162, 2
    %v178 = vpop.permute.xlu0 %177
    %v181 = vsel %vm40, %v170, %v176
    %v182 = vsel %vm40, %v172, %v178
    %v183 = vmul.f32 %v181, %v45
    %v184 = vmul.f32 %v182, %v45
    %185 = vrot.lane.b32.xlu0 %v161, 97
    %v186 = vpop.permute.xlu0 %185
    %187 = vrot.lane.b32.xlu0 %v162, 97
    %v188 = vpop.permute.xlu0 %187
    %191 = vrot.lane.b32.xlu0 %v161, 1
    %v192 = vpop.permute.xlu0 %191
    %193 = vrot.lane.b32.xlu0 %v162, 1
    %v194 = vpop.permute.xlu0 %193
    %v197 = vsel %vm53, %v186, %v192
    %v198 = vsel %vm53, %v188, %v194
    %v199 = vmul.f32 %v197, %v58
    %v200 = vmul.f32 %v198, %v58
    %201 = vrot.lane.b32.xlu0 %v161, 127
    %v202 = vpop.permute.xlu0 %201
    %203 = vrot.lane.b32.xlu0 %v162, 127
    %v204 = vpop.permute.xlu0 %203
    %207 = vrot.lane.b32.xlu0 %v161, 31
    %v208 = vpop.permute.xlu0 %207
    %209 = vrot.lane.b32.xlu0 %v162, 31
    %v210 = vpop.permute.xlu0 %209
    %v213 = vsel %vm66, %v202, %v208
    %v214 = vsel %vm66, %v204, %v210
    %v215 = vmul.f32 %v213, %v71
    %v216 = vmul.f32 %v214, %v71
    %217 = vrot.lane.b32.xlu0 %v161, 126
    %v218 = vpop.permute.xlu0 %217
    %219 = vrot.lane.b32.xlu0 %v162, 126
    %v220 = vpop.permute.xlu0 %219
    %223 = vrot.lane.b32.xlu0 %v161, 30
    %v224 = vpop.permute.xlu0 %223
    %225 = vrot.lane.b32.xlu0 %v162, 30
    %v226 = vpop.permute.xlu0 %225
    %v229 = vsel %vm79, %v218, %v224
    %v230 = vsel %vm79, %v220, %v226
    %v231 = vmul.f32 %v229, %v84
    %v232 = vmul.f32 %v230, %v84
    %v233 = vpack.c.bf16 %v184, %v183
    %v234 = vpack.c.bf16 %v200, %v199
    %v235 = vpack.c.bf16 %v162, %v161
    %v236 = vpack.c.bf16 %v216, %v215
    %v237 = vpack.c.bf16 %v232, %v231
    %239 = vset.pattern.permute.xlu0 0
    %240 = vperm.xlu0 %239, %v165
    %v241 = vpop.permute.xlu0 %240
    %244 = vset.pattern.permute.xlu0 0
    %245 = vperm.xlu0 %244, %v166
    %v246 = vpop.permute.xlu0 %245
    %v250 = vunpack.c.l.b16 %v163
    %v251 = vunpack.c.l.b16 %v164
    %v252 = vpack.c.b16 %v251, %v250
    %vm253 = vcmask 654336
    %v255 = vsel %vm253, %v252, 0
    %257 = vmatprep.subr.bf16.mxu0 0
    %258 = vmatpush1.bf16.msra.mxu0 0
    %259 = vmatprep.subr.bf16.mxu0 0
    %260 = vmatpush1.bf16.msra.mxu0 0
    %261 = vmatprep.subr.bf16.mxu0 0
    %262 = vmatpush1.bf16.msra.mxu0 0
    %263 = vmatprep.subr.bf16.mxu0 0
    %264 = vmatpush1.bf16.msra.mxu0 %v237
    %265 = vmatprep.subr.bf16.mxu0 0
    %266 = vmatpush1.bf16.msra.mxu0 %v236
    %267 = vmatprep.subr.bf16.mxu0 0
    %268 = vmatpush1.bf16.msra.mxu0 %v235
    %269 = vmatprep.subr.bf16.mxu0 0
    %270 = vmatpush1.bf16.msra.mxu0 %v234
    %271 = vmatprep.subr.bf16.mxu0 0
    %272 = vmatpush1.bf16.msra.mxu0 %v233
    %273 = vmatprep.subr.bf16.mxu0 0
    %274 = vmatpush2.bf16.msra.mxu0 0
    %275 = vmatprep.subr.bf16.mxu0 0
    %276 = vmatpush2.bf16.msra.mxu0 0
    %277 = vmatprep.subr.bf16.mxu0 0
    %278 = vmatpush2.bf16.msra.mxu0 0
    %279 = vmatprep.subr.bf16.mxu0 0
    %280 = vmatpush2.bf16.msra.mxu0 0
    %281 = vmatprep.subr.bf16.mxu0 0
    %282 = vmatpush2.bf16.msra.mxu0 0
    %283 = vmatprep.subr.bf16.mxu0 0
    %284 = vmatpush2.bf16.msra.mxu0 0
    %285 = vmatprep.subr.bf16.mxu0 0
    %286 = vmatpush2.bf16.msra.mxu0 0
    %287 = vmatprep.subr.bf16.mxu0 0
    %288 = vmatpush2.bf16.msra.mxu0 0
    %289 = vmatprep.mubr.bf16.mxu0 0
    %290 = vmatmul.mubr.bf16.gmra.mxu0 %v255
    %v291 = vpop.f32.mrf.mxu0
    %v292 = vadd.f32 %v241, %v291
    %v293 = vpop.f32.mrf.mxu0
    %v294 = vpop.f32.mrf.mxu0
    %v295 = vadd.f32 %v246, %v294
    %v296 = vpop.f32.mrf.mxu0
    %297 = vdwg.mxu0
    %v298 = vmax.f32 %v292, 0.0
    %v299 = vmax.f32 %v295, 0.0
    %v300 = vld [vmem:[%s1 + $0x10] sm:$0xf]
    %v301 = vld [vmem:[%s1 + $0x14] sm:$0xf]
    %v302 = vld [vmem:[%s2 + $0x20] sm:$0xff]
    %v303 = vld [vmem:[%s2 + $0x28] sm:$0xff]
    %306 = vrot.lane.b32.xlu0 %v298, 98
    %v307 = vpop.permute.xlu0 %306
    %308 = vrot.lane.b32.xlu0 %v299, 98
    %v309 = vpop.permute.xlu0 %308
    %312 = vrot.lane.b32.xlu0 %v298, 2
    %v313 = vpop.permute.xlu0 %312
    %314 = vrot.lane.b32.xlu0 %v299, 2
    %v315 = vpop.permute.xlu0 %314
    %v318 = vsel %vm40, %v307, %v313
    %v319 = vsel %vm40, %v309, %v315
    %v320 = vmul.f32 %v318, %v45
    %v321 = vmul.f32 %v319, %v45
    %322 = vrot.lane.b32.xlu0 %v298, 97
    %v323 = vpop.permute.xlu0 %322
    %324 = vrot.lane.b32.xlu0 %v299, 97
    %v325 = vpop.permute.xlu0 %324
    %328 = vrot.lane.b32.xlu0 %v298, 1
    %v329 = vpop.permute.xlu0 %328
    %330 = vrot.lane.b32.xlu0 %v299, 1
    %v331 = vpop.permute.xlu0 %330
    %v334 = vsel %vm53, %v323, %v329
    %v335 = vsel %vm53, %v325, %v331
    %v336 = vmul.f32 %v334, %v58
    %v337 = vmul.f32 %v335, %v58
    %338 = vrot.lane.b32.xlu0 %v298, 127
    %v339 = vpop.permute.xlu0 %338
    %340 = vrot.lane.b32.xlu0 %v299, 127
    %v341 = vpop.permute.xlu0 %340
    %344 = vrot.lane.b32.xlu0 %v298, 31
    %v345 = vpop.permute.xlu0 %344
    %346 = vrot.lane.b32.xlu0 %v299, 31
    %v347 = vpop.permute.xlu0 %346
    %v350 = vsel %vm66, %v339, %v345
    %v351 = vsel %vm66, %v341, %v347
    %v352 = vmul.f32 %v350, %v71
    %v353 = vmul.f32 %v351, %v71
    %354 = vrot.lane.b32.xlu0 %v298, 126
    %v355 = vpop.permute.xlu0 %354
    %356 = vrot.lane.b32.xlu0 %v299, 126
    %v357 = vpop.permute.xlu0 %356
    %360 = vrot.lane.b32.xlu0 %v298, 30
    %v361 = vpop.permute.xlu0 %360
    %362 = vrot.lane.b32.xlu0 %v299, 30
    %v363 = vpop.permute.xlu0 %362
    %v366 = vsel %vm79, %v355, %v361
    %v367 = vsel %vm79, %v357, %v363
    %v368 = vmul.f32 %v366, %v84
    %v369 = vmul.f32 %v367, %v84
    %v370 = vpack.c.bf16 %v321, %v320
    %v371 = vpack.c.bf16 %v337, %v336
    %v372 = vpack.c.bf16 %v299, %v298
    %v373 = vpack.c.bf16 %v353, %v352
    %v374 = vpack.c.bf16 %v369, %v368
    %376 = vset.pattern.permute.xlu0 0
    %377 = vperm.xlu0 %376, %v302
    %v378 = vpop.permute.xlu0 %377
    %381 = vset.pattern.permute.xlu0 0
    %382 = vperm.xlu0 %381, %v303
    %v383 = vpop.permute.xlu0 %382
    %v387 = vunpack.c.l.b16 %v300
    %v388 = vunpack.c.l.b16 %v301
    %v389 = vpack.c.b16 %v388, %v387
    %v391 = vsel %vm253, %v389, 0
    %393 = vmatprep.subr.bf16.mxu0 0
    %394 = vmatpush1.bf16.msra.mxu0 0
    %395 = vmatprep.subr.bf16.mxu0 0
    %396 = vmatpush1.bf16.msra.mxu0 0
    %397 = vmatprep.subr.bf16.mxu0 0
    %398 = vmatpush1.bf16.msra.mxu0 0
    %399 = vmatprep.subr.bf16.mxu0 0
    %400 = vmatpush1.bf16.msra.mxu0 %v374
    %401 = vmatprep.subr.bf16.mxu0 0
    %402 = vmatpush1.bf16.msra.mxu0 %v373
    %403 = vmatprep.subr.bf16.mxu0 0
    %404 = vmatpush1.bf16.msra.mxu0 %v372
    %405 = vmatprep.subr.bf16.mxu0 0
    %406 = vmatpush1.bf16.msra.mxu0 %v371
    %407 = vmatprep.subr.bf16.mxu0 0
    %408 = vmatpush1.bf16.msra.mxu0 %v370
    %409 = vmatprep.subr.bf16.mxu0 0
    %410 = vmatpush2.bf16.msra.mxu0 0
    %411 = vmatprep.subr.bf16.mxu0 0
    %412 = vmatpush2.bf16.msra.mxu0 0
    %413 = vmatprep.subr.bf16.mxu0 0
    %414 = vmatpush2.bf16.msra.mxu0 0
    %415 = vmatprep.subr.bf16.mxu0 0
    %416 = vmatpush2.bf16.msra.mxu0 0
    %417 = vmatprep.subr.bf16.mxu0 0
    %418 = vmatpush2.bf16.msra.mxu0 0
    %419 = vmatprep.subr.bf16.mxu0 0
    %420 = vmatpush2.bf16.msra.mxu0 0
    %421 = vmatprep.subr.bf16.mxu0 0
    %422 = vmatpush2.bf16.msra.mxu0 0
    %423 = vmatprep.subr.bf16.mxu0 0
    %424 = vmatpush2.bf16.msra.mxu0 0
    %425 = vmatprep.mubr.bf16.mxu0 0
    %426 = vmatmul.mubr.bf16.gmra.mxu0 %v391
    %v427 = vpop.f32.mrf.mxu0
    %v428 = vadd.f32 %v378, %v427
    %v429 = vpop.f32.mrf.mxu0
    %v430 = vpop.f32.mrf.mxu0
    %v431 = vadd.f32 %v383, %v430
    %v432 = vpop.f32.mrf.mxu0
    %433 = vdwg.mxu0
    %v434 = vmax.f32 %v428, 0.0
    %v435 = vmax.f32 %v431, 0.0
    %v436 = vadd.f32 %v161, %v434
    %v437 = vadd.f32 %v162, %v435
    %v438 = vld [vmem:[%s1 + $0x28] sm:$0xf]
    %v439 = vld [vmem:[%s1 + $0x2c] sm:$0xf]
    %v440 = vld [vmem:[%s1 + $0x30] sm:$0xf]
    %v441 = vld [vmem:[%s1 + $0x34] sm:$0xf]
    %v442 = vpack.c.bf16 %v437, %v436
    %v447 = vunpack.c.l.b16 %v438
    %v448 = vunpack.c.l.b16 %v439
    %v449 = vunpack.c.l.b16 %v440
    %v450 = vunpack.c.l.b16 %v441
    %v451 = vpack.c.b16 %v448, %v447
    %v452 = vpack.c.b16 %v450, %v449
    %vm455 = vcmask 261120
    %v457 = vsel %vm455, %v442, 0
    %459 = vmatprep.subr.bf16.mxu0 0
    %460 = vmatpush1.bf16.msra.mxu0 0
    %461 = vmatprep.subr.bf16.mxu0 0
    %462 = vmatpush1.bf16.msra.mxu0 0
    %463 = vmatprep.subr.bf16.mxu0 0
    %464 = vmatpush1.bf16.msra.mxu0 0
    %465 = vmatprep.subr.bf16.mxu0 0
    %466 = vmatpush1.bf16.msra.mxu0 0
    %467 = vmatprep.subr.bf16.mxu0 0
    %468 = vmatpush1.bf16.msra.mxu0 0
    %469 = vmatprep.subr.bf16.mxu0 0
    %470 = vmatpush1.bf16.msra.mxu0 0
    %471 = vmatprep.subr.bf16.mxu0 0
    %472 = vmatpush1.bf16.msra.mxu0 %v452
    %473 = vmatprep.subr.bf16.mxu0 0
    %474 = vmatpush1.bf16.msra.mxu0 %v451
    %475 = vmatprep.subr.bf16.mxu0 0
    %476 = vmatpush2.bf16.msra.mxu0 0
    %477 = vmatprep.subr.bf16.mxu0 0
    %478 = vmatpush2.bf16.msra.mxu0 0
    %479 = vmatprep.subr.bf16.mxu0 0
    %480 = vmatpush2.bf16.msra.mxu0 0
    %481 = vmatprep.subr.bf16.mxu0 0
    %482 = vmatpush2.bf16.msra.mxu0 0
    %483 = vmatprep.subr.bf16.mxu0 0
    %484 = vmatpush2.bf16.msra.mxu0 0
    %485 = vmatprep.subr.bf16.mxu0 0
    %486 = vmatpush2.bf16.msra.mxu0 0
    %487 = vmatprep.subr.bf16.mxu0 0
    %488 = vmatpush2.bf16.msra.mxu0 0
    %489 = vmatprep.subr.bf16.mxu0 0
    %490 = vmatpush2.bf16.msra.mxu0 0
    %491 = vmatprep.mubr.bf16.mxu0 0
    %492 = vmatmul.mubr.bf16.gmra.mxu0 %v457
    %v493 = vpop.f32.mrf.mxu0
    %v494 = vadd.f32 0.0, %v493
    %v495 = vpop.f32.mrf.mxu0
    %v496 = vpop.f32.mrf.mxu0
    %v497 = vadd.f32 0.0, %v496
    %v498 = vpop.f32.mrf.mxu0
    %499 = vdwg.mxu0
    %502 = vrot.lane.b32.xlu0 %v494, 112
    %v503 = vpop.permute.xlu0 %502
    %504 = vrot.lane.b32.xlu0 %v497, 112
    %v505 = vpop.permute.xlu0 %504
    %v508 = vmax.f32 %v494, %v503
    %v509 = vmax.f32 %v497, %v505
    %510 = vrot.lane.b32.xlu0 %v494, 96
    %v511 = vpop.permute.xlu0 %510
    %512 = vrot.lane.b32.xlu0 %v497, 96
    %v513 = vpop.permute.xlu0 %512
    %v516 = vmax.f32 %v508, %v511
    %v517 = vmax.f32 %v509, %v513
    %518 = vrot.lane.b32.xlu0 %v494, 80
    %v519 = vpop.permute.xlu0 %518
    %520 = vrot.lane.b32.xlu0 %v497, 80
    %v521 = vpop.permute.xlu0 %520
    %v524 = vmax.f32 %v516, %v519
    %v525 = vmax.f32 %v517, %v521
    %526 = vrot.lane.b32.xlu0 %v494, 64
    %v527 = vpop.permute.xlu0 %526
    %528 = vrot.lane.b32.xlu0 %v497, 64
    %v529 = vpop.permute.xlu0 %528
    %v532 = vmax.f32 %v524, %v527
    %v533 = vmax.f32 %v525, %v529
    %v534 = vld [vmem:[%s1 + $0x18] sm:$0xf]
    %v535 = vld [vmem:[%s1 + $0x1c] sm:$0xf]
    %v536 = vld [vmem:[%s2 + $0x30] sm:$0xff]
    %v537 = vld [vmem:[%s2 + $0x38] sm:$0xff]
    %540 = vrot.lane.b32.xlu0 %v532, 114
    %v541 = vpop.permute.xlu0 %540
    %542 = vrot.lane.b32.xlu0 %v533, 114
    %v543 = vpop.permute.xlu0 %542
    %546 = vrot.lane.b32.xlu0 %v532, 2
    %v547 = vpop.permute.xlu0 %546
    %548 = vrot.lane.b32.xlu0 %v533, 2
    %v549 = vpop.permute.xlu0 %548
    %v552 = vsel %vm40, %v541, %v547
    %v553 = vsel %vm40, %v543, %v549
    %v554 = vlaneseq
    %v555 = vshrl.u32 %v554, 7
    %v556 = vsub.s32 0, %v555
    %v557 = vrot.slane %v26, %v556
    %v558 = vmul.f32 %v552, %v557
    %v559 = vmul.f32 %v553, %v557
    %560 = vrot.lane.b32.xlu0 %v532, 113
    %v561 = vpop.permute.xlu0 %560
    %562 = vrot.lane.b32.xlu0 %v533, 113
    %v563 = vpop.permute.xlu0 %562
    %566 = vrot.lane.b32.xlu0 %v532, 1
    %v567 = vpop.permute.xlu0 %566
    %568 = vrot.lane.b32.xlu0 %v533, 1
    %v569 = vpop.permute.xlu0 %568
    %v572 = vsel %vm53, %v561, %v567
    %v573 = vsel %vm53, %v563, %v569
    %v574 = vlaneseq
    %v575 = vshrl.u32 %v574, 7
    %v576 = vsub.s32 1, %v575
    %v577 = vrot.slane %v26, %v576
    %v578 = vmul.f32 %v572, %v577
    %v579 = vmul.f32 %v573, %v577
    %580 = vrot.lane.b32.xlu0 %v532, 127
    %v581 = vpop.permute.xlu0 %580
    %582 = vrot.lane.b32.xlu0 %v533, 127
    %v583 = vpop.permute.xlu0 %582
    %586 = vrot.lane.b32.xlu0 %v532, 15
    %v587 = vpop.permute.xlu0 %586
    %588 = vrot.lane.b32.xlu0 %v533, 15
    %v589 = vpop.permute.xlu0 %588
    %vm592 = vcmask 121856
    %v593 = vsel %vm592, %v581, %v587
    %v594 = vsel %vm592, %v583, %v589
    %v595 = vlaneseq
    %v596 = vshrl.u32 %v595, 7
    %v597 = vsub.s32 3, %v596
    %v598 = vrot.slane %v26, %v597
    %v599 = vmul.f32 %v593, %v598
    %v600 = vmul.f32 %v594, %v598
    %601 = vrot.lane.b32.xlu0 %v532, 126
    %v602 = vpop.permute.xlu0 %601
    %603 = vrot.lane.b32.xlu0 %v533, 126
    %v604 = vpop.permute.xlu0 %603
    %607 = vrot.lane.b32.xlu0 %v532, 14
    %v608 = vpop.permute.xlu0 %607
    %609 = vrot.lane.b32.xlu0 %v533, 14
    %v610 = vpop.permute.xlu0 %609
    %vm613 = vcmask 113664
    %v614 = vsel %vm613, %v602, %v608
    %v615 = vsel %vm613, %v604, %v610
    %v616 = vlaneseq
    %v617 = vshrl.u32 %v616, 7
    %v618 = vsub.s32 4, %v617
    %v619 = vrot.slane %v26, %v618
    %v620 = vmul.f32 %v614, %v619
    %v621 = vmul.f32 %v615, %v619
    %v622 = vpack.c.bf16 %v559, %v558
    %v623 = vpack.c.bf16 %v579, %v578
    %v624 = vpack.c.bf16 %v533, %v532
    %v625 = vpack.c.bf16 %v600, %v599
    %v626 = vpack.c.bf16 %v621, %v620
    %628 = vset.pattern.permute.xlu0 0
    %629 = vperm.xlu0 %628, %v536
    %v630 = vpop.permute.xlu0 %629
    %633 = vset.pattern.permute.xlu0 0
    %634 = vperm.xlu0 %633, %v537
    %v635 = vpop.permute.xlu0 %634
    %v639 = vunpack.c.l.b16 %v534
    %v640 = vunpack.c.l.b16 %v535
    %v641 = vpack.c.b16 %v640, %v639
    %v643 = vsel %vm253, %v641, 0
    %645 = vmatprep.subr.bf16.mxu0 0
    %646 = vmatpush1.bf16.msra.mxu0 0
    %647 = vmatprep.subr.bf16.mxu0 0
    %648 = vmatpush1.bf16.msra.mxu0 0
    %649 = vmatprep.subr.bf16.mxu0 0
    %650 = vmatpush1.bf16.msra.mxu0 0
    %651 = vmatprep.subr.bf16.mxu0 0
    %652 = vmatpush1.bf16.msra.mxu0 %v626
    %653 = vmatprep.subr.bf16.mxu0 0
    %654 = vmatpush1.bf16.msra.mxu0 %v625
    %655 = vmatprep.subr.bf16.mxu0 0
    %656 = vmatpush1.bf16.msra.mxu0 %v624
    %657 = vmatprep.subr.bf16.mxu0 0
    %658 = vmatpush1.bf16.msra.mxu0 %v623
    %659 = vmatprep.subr.bf16.mxu0 0
    %660 = vmatpush1.bf16.msra.mxu0 %v622
    %661 = vmatprep.subr.bf16.mxu0 0
    %662 = vmatpush2.bf16.msra.mxu0 0
    %663 = vmatprep.subr.bf16.mxu0 0
    %664 = vmatpush2.bf16.msra.mxu0 0
    %665 = vmatprep.subr.bf16.mxu0 0
    %666 = vmatpush2.bf16.msra.mxu0 0
    %667 = vmatprep.subr.bf16.mxu0 0
    %668 = vmatpush2.bf16.msra.mxu0 0
    %669 = vmatprep.subr.bf16.mxu0 0
    %670 = vmatpush2.bf16.msra.mxu0 0
    %671 = vmatprep.subr.bf16.mxu0 0
    %672 = vmatpush2.bf16.msra.mxu0 0
    %673 = vmatprep.subr.bf16.mxu0 0
    %674 = vmatpush2.bf16.msra.mxu0 0
    %675 = vmatprep.subr.bf16.mxu0 0
    %676 = vmatpush2.bf16.msra.mxu0 0
    %677 = vmatprep.mubr.bf16.mxu0 0
    %678 = vmatmul.mubr.bf16.gmra.mxu0 %v643
    %v679 = vpop.f32.mrf.mxu0
    %v680 = vadd.f32 %v630, %v679
    %v681 = vpop.f32.mrf.mxu0
    %v682 = vpop.f32.mrf.mxu0
    %v683 = vadd.f32 %v635, %v682
    %v684 = vpop.f32.mrf.mxu0
    %685 = vdwg.mxu0
    %v686 = vmax.f32 %v680, 0.0
    %v687 = vmax.f32 %v683, 0.0
    %v688 = vld [vmem:[%s1 + $0x38] sm:$0xf]
    %v689 = vld [vmem:[%s1 + $0x3c] sm:$0xf]
    %v690 = vpack.c.bf16 %v687, %v686
    %v693 = vunpack.c.l.b16 %v688
    %v694 = vunpack.c.l.b16 %v689
    %v695 = vpack.c.b16 %v694, %v693
    %vm697 = vcmask 130048
    %v699 = vsel %vm697, %v690, 0
    %701 = vmatprep.subr.bf16.mxu0 0
    %702 = vmatpush1.bf16.msra.mxu0 0
    %703 = vmatprep.subr.bf16.mxu0 0
    %704 = vmatpush1.bf16.msra.mxu0 0
    %705 = vmatprep.subr.bf16.mxu0 0
    %706 = vmatpush1.bf16.msra.mxu0 0
    %707 = vmatprep.subr.bf16.mxu0 0
    %708 = vmatpush1.bf16.msra.mxu0 0
    %709 = vmatprep.subr.bf16.mxu0 0
    %710 = vmatpush1.bf16.msra.mxu0 0
    %711 = vmatprep.subr.bf16.mxu0 0
    %712 = vmatpush1.bf16.msra.mxu0 0
    %713 = vmatprep.subr.bf16.mxu0 0
    %714 = vmatpush1.bf16.msra.mxu0 0
    %715 = vmatprep.subr.bf16.mxu0 0
    %716 = vmatpush1.bf16.msra.mxu0 %v695
    %717 = vmatprep.subr.bf16.mxu0 0
    %718 = vmatpush2.bf16.msra.mxu0 0
    %719 = vmatprep.subr.bf16.mxu0 0
    %720 = vmatpush2.bf16.msra.mxu0 0
    %721 = vmatprep.subr.bf16.mxu0 0
    %722 = vmatpush2.bf16.msra.mxu0 0
    %723 = vmatprep.subr.bf16.mxu0 0
    %724 = vmatpush2.bf16.msra.mxu0 0
    %725 = vmatprep.subr.bf16.mxu0 0
    %726 = vmatpush2.bf16.msra.mxu0 0
    %727 = vmatprep.subr.bf16.mxu0 0
    %728 = vmatpush2.bf16.msra.mxu0 0
    %729 = vmatprep.subr.bf16.mxu0 0
    %730 = vmatpush2.bf16.msra.mxu0 0
    %731 = vmatprep.subr.bf16.mxu0 0
    %732 = vmatpush2.bf16.msra.mxu0 0
    %733 = vmatprep.mubr.bf16.mxu0 0
    %734 = vmatmul.mubr.bf16.gmra.mxu0 %v699
    %v735 = vpop.f32.mrf.mxu0
    %v736 = vadd.f32 0.0, %v735
    %v737 = vpop.f32.mrf.mxu0
    %v738 = vpop.f32.mrf.mxu0
    %v739 = vadd.f32 0.0, %v738
    %v740 = vpop.f32.mrf.mxu0
    %741 = vdwg.mxu0
    %744 = vrot.lane.b32.xlu0 %v736, 120
    %v745 = vpop.permute.xlu0 %744
    %746 = vrot.lane.b32.xlu0 %v739, 120
    %v747 = vpop.permute.xlu0 %746
    %v750 = vmax.f32 %v736, %v745
    %v751 = vmax.f32 %v739, %v747
    %752 = vrot.lane.b32.xlu0 %v736, 112
    %v753 = vpop.permute.xlu0 %752
    %754 = vrot.lane.b32.xlu0 %v739, 112
    %v755 = vpop.permute.xlu0 %754
    %v758 = vmax.f32 %v750, %v753
    %v759 = vmax.f32 %v751, %v755
    %760 = vrot.lane.b32.xlu0 %v736, 104
    %v761 = vpop.permute.xlu0 %760
    %762 = vrot.lane.b32.xlu0 %v739, 104
    %v763 = vpop.permute.xlu0 %762
    %v766 = vmax.f32 %v758, %v761
    %v767 = vmax.f32 %v759, %v763
    %768 = vrot.lane.b32.xlu0 %v736, 96
    %v769 = vpop.permute.xlu0 %768
    %770 = vrot.lane.b32.xlu0 %v739, 96
    %v771 = vpop.permute.xlu0 %770
    %v774 = vmax.f32 %v766, %v769
    %v775 = vmax.f32 %v767, %v771
    %v776 = vld [vmem:[%s1 + $0x20] sm:$0xf]
    %v777 = vld [vmem:[%s2 + $0x40] sm:$0xff]
    %780 = vrot.lane.b32.xlu0 %v774, 122
    %v781 = vpop.permute.xlu0 %780
    %782 = vrot.lane.b32.xlu0 %v775, 122
    %v783 = vpop.permute.xlu0 %782
    %786 = vrot.lane.b32.xlu0 %v774, 2
    %v787 = vpop.permute.xlu0 %786
    %788 = vrot.lane.b32.xlu0 %v775, 2
    %v789 = vpop.permute.xlu0 %788
    %v792 = vsel %vm40, %v781, %v787
    %v793 = vsel %vm40, %v783, %v789
    %v794 = vlaneseq
    %v795 = vshrl.u32 %v794, 7
    %v796 = vsub.s32 0, %v795
    %v797 = vrot.slane %v27, %v796
    %v798 = vmul.f32 %v792, %v797
    %v799 = vmul.f32 %v793, %v797
    %800 = vrot.lane.b32.xlu0 %v774, 121
    %v801 = vpop.permute.xlu0 %800
    %802 = vrot.lane.b32.xlu0 %v775, 121
    %v803 = vpop.permute.xlu0 %802
    %806 = vrot.lane.b32.xlu0 %v774, 1
    %v807 = vpop.permute.xlu0 %806
    %808 = vrot.lane.b32.xlu0 %v775, 1
    %v809 = vpop.permute.xlu0 %808
    %v812 = vsel %vm53, %v801, %v807
    %v813 = vsel %vm53, %v803, %v809
    %v814 = vlaneseq
    %v815 = vshrl.u32 %v814, 7
    %v816 = vsub.s32 1, %v815
    %v817 = vrot.slane %v27, %v816
    %v818 = vmul.f32 %v812, %v817
    %v819 = vmul.f32 %v813, %v817
    %820 = vrot.lane.b32.xlu0 %v774, 127
    %v821 = vpop.permute.xlu0 %820
    %822 = vrot.lane.b32.xlu0 %v775, 127
    %v823 = vpop.permute.xlu0 %822
    %826 = vrot.lane.b32.xlu0 %v774, 7
    %v827 = vpop.permute.xlu0 %826
    %828 = vrot.lane.b32.xlu0 %v775, 7
    %v829 = vpop.permute.xlu0 %828
    %vm832 = vcmask 56320
    %v833 = vsel %vm832, %v821, %v827
    %v834 = vsel %vm832, %v823, %v829
    %v835 = vlaneseq
    %v836 = vshrl.u32 %v835, 7
    %v837 = vsub.s32 3, %v836
    %v838 = vrot.slane %v27, %v837
    %v839 = vmul.f32 %v833, %v838
    %v840 = vmul.f32 %v834, %v838
    %841 = vrot.lane.b32.xlu0 %v774, 126
    %v842 = vpop.permute.xlu0 %841
    %843 = vrot.lane.b32.xlu0 %v775, 126
    %v844 = vpop.permute.xlu0 %843
    %847 = vrot.lane.b32.xlu0 %v774, 6
    %v848 = vpop.permute.xlu0 %847
    %849 = vrot.lane.b32.xlu0 %v775, 6
    %v850 = vpop.permute.xlu0 %849
    %vm853 = vcmask 48128
    %v854 = vsel %vm853, %v842, %v848
    %v855 = vsel %vm853, %v844, %v850
    %v856 = vlaneseq
    %v857 = vshrl.u32 %v856, 7
    %v858 = vsub.s32 4, %v857
    %v859 = vrot.slane %v27, %v858
    %v860 = vmul.f32 %v854, %v859
    %v861 = vmul.f32 %v855, %v859
    %v862 = vpack.c.bf16 %v799, %v798
    %v863 = vpack.c.bf16 %v819, %v818
    %v864 = vpack.c.bf16 %v775, %v774
    %v865 = vpack.c.bf16 %v840, %v839
    %v866 = vpack.c.bf16 %v861, %v860
    %868 = vset.pattern.permute.xlu0 0
    %869 = vperm.xlu0 %868, %v777
    %v870 = vpop.permute.xlu0 %869
    %v873 = vsel %vm253, %v776, 0
    %875 = vmatprep.subr.bf16.mxu0 0
    %876 = vmatpush1.bf16.msra.mxu0 0
    %877 = vmatprep.subr.bf16.mxu0 0
    %878 = vmatpush1.bf16.msra.mxu0 0
    %879 = vmatprep.subr.bf16.mxu0 0
    %880 = vmatpush1.bf16.msra.mxu0 0
    %881 = vmatprep.subr.bf16.mxu0 0
    %882 = vmatpush1.bf16.msra.mxu0 %v866
    %883 = vmatprep.subr.bf16.mxu0 0
    %884 = vmatpush1.bf16.msra.mxu0 %v865
    %885 = vmatprep.subr.bf16.mxu0 0
    %886 = vmatpush1.bf16.msra.mxu0 %v864
    %887 = vmatprep.subr.bf16.mxu0 0
    %888 = vmatpush1.bf16.msra.mxu0 %v863
    %889 = vmatprep.subr.bf16.mxu0 0
    %890 = vmatpush1.bf16.msra.mxu0 %v862
    %891 = vmatprep.subr.bf16.mxu0 0
    %892 = vmatpush2.bf16.msra.mxu0 0
    %893 = vmatprep.subr.bf16.mxu0 0
    %894 = vmatpush2.bf16.msra.mxu0 0
    %895 = vmatprep.subr.bf16.mxu0 0
    %896 = vmatpush2.bf16.msra.mxu0 0
    %897 = vmatprep.subr.bf16.mxu0 0
    %898 = vmatpush2.bf16.msra.mxu0 0
    %899 = vmatprep.subr.bf16.mxu0 0
    %900 = vmatpush2.bf16.msra.mxu0 0
    %901 = vmatprep.subr.bf16.mxu0 0
    %902 = vmatpush2.bf16.msra.mxu0 0
    %903 = vmatprep.subr.bf16.mxu0 0
    %904 = vmatpush2.bf16.msra.mxu0 0
    %905 = vmatprep.subr.bf16.mxu0 0
    %906 = vmatpush2.bf16.msra.mxu0 0
    %907 = vmatprep.mubr.bf16.mxu0 0
    %908 = vmatmul.mubr.bf16.gmra.mxu0 %v873
    %v909 = vpop.f32.mrf.mxu0
    %v910 = vadd.f32 %v870, %v909
    %v911 = vpop.f32.mrf.mxu0
    %v912 = vpop.f32.mrf.mxu0
    %v913 = vpop.f32.mrf.mxu0
    %914 = vdwg.mxu0
    %v915 = vmax.f32 %v910, 0.0
    %v916 = vpack.c.bf16 %v915, %v915
    %v917 = vld [vmem:[%s4] sm:$0xf]
    %v918 = vld [vmem:[%s4 + $0x8] sm:$0xf]
    %v920 = vshrl.u32 %v916, 16
    %vm922 = vcmask 64512
    %v924 = vsel %vm922, %v920, 0
    %v927 = vsel %vm92, %v918, 0
    %929 = vmatprep.subr.bf16.mxu0 0
    %930 = vmatpush1.bf16.msra.mxu0 0
    %931 = vmatprep.subr.bf16.mxu0 0
    %932 = vmatpush1.bf16.msra.mxu0 0
    %933 = vmatprep.subr.bf16.mxu0 0
    %934 = vmatpush1.bf16.msra.mxu0 0
    %935 = vmatprep.subr.bf16.mxu0 0
    %936 = vmatpush1.bf16.msra.mxu0 0
    %937 = vmatprep.subr.bf16.mxu0 0
    %938 = vmatpush1.bf16.msra.mxu0 0
    %939 = vmatprep.subr.bf16.mxu0 0
    %940 = vmatpush1.bf16.msra.mxu0 0
    %941 = vmatprep.subr.bf16.mxu0 0
    %942 = vmatpush1.bf16.msra.mxu0 0
    %943 = vmatprep.subr.bf16.mxu0 0
    %944 = vmatpush1.bf16.msra.mxu0 %v927
    %945 = vmatprep.subr.bf16.mxu0 0
    %946 = vmatpush2.bf16.msra.mxu0 0
    %947 = vmatprep.subr.bf16.mxu0 0
    %948 = vmatpush2.bf16.msra.mxu0 0
    %949 = vmatprep.subr.bf16.mxu0 0
    %950 = vmatpush2.bf16.msra.mxu0 0
    %951 = vmatprep.subr.bf16.mxu0 0
    %952 = vmatpush2.bf16.msra.mxu0 0
    %953 = vmatprep.subr.bf16.mxu0 0
    %954 = vmatpush2.bf16.msra.mxu0 0
    %955 = vmatprep.subr.bf16.mxu0 0
    %956 = vmatpush2.bf16.msra.mxu0 0
    %957 = vmatprep.subr.bf16.mxu0 0
    %958 = vmatpush2.bf16.msra.mxu0 0
    %959 = vmatprep.subr.bf16.mxu0 0
    %960 = vmatpush2.bf16.msra.mxu0 0
    %961 = vmatprep.mubr.bf16.mxu0 0
    %962 = vmatmul.mubr.bf16.gmra.mxu0 %v924
    %v963 = vpop.f32.mrf.mxu0
    %v964 = vadd.f32 0.0, %v963
    %v965 = vpop.f32.mrf.mxu0
    %v966 = vpop.f32.mrf.mxu0
    %v967 = vpop.f32.mrf.mxu0
    %968 = vdwg.mxu0
    %v969 = vld [vmem:[%s4 + $0x10] sm:$0xf]
    %v970 = vld [vmem:[%s4 + $0x18] sm:$0xf]
    %v971 = vrot.slane %v920, 1
    %v973 = vsel %vm922, %v971, 0
    %v976 = vsel %vm92, %v970, 0
    %978 = vmatprep.subr.bf16.mxu0 0
    %979 = vmatpush1.bf16.msra.mxu0 0
    %980 = vmatprep.subr.bf16.mxu0 0
    %981 = vmatpush1.bf16.msra.mxu0 0
    %982 = vmatprep.subr.bf16.mxu0 0
    %983 = vmatpush1.bf16.msra.mxu0 0
    %984 = vmatprep.subr.bf16.mxu0 0
    %985 = vmatpush1.bf16.msra.mxu0 0
    %986 = vmatprep.subr.bf16.mxu0 0
    %987 = vmatpush1.bf16.msra.mxu0 0
    %988 = vmatprep.subr.bf16.mxu0 0
    %989 = vmatpush1.bf16.msra.mxu0 0
    %990 = vmatprep.subr.bf16.mxu0 0
    %991 = vmatpush1.bf16.msra.mxu0 0
    %992 = vmatprep.subr.bf16.mxu0 0
    %993 = vmatpush1.bf16.msra.mxu0 %v976
    %994 = vmatprep.subr.bf16.mxu0 0
    %995 = vmatpush2.bf16.msra.mxu0 0
    %996 = vmatprep.subr.bf16.mxu0 0
    %997 = vmatpush2.bf16.msra.mxu0 0
    %998 = vmatprep.subr.bf16.mxu0 0
    %999 = vmatpush2.bf16.msra.mxu0 0
    %1000 = vmatprep.subr.bf16.mxu0 0
    %1001 = vmatpush2.bf16.msra.mxu0 0
    %1002 = vmatprep.subr.bf16.mxu0 0
    %1003 = vmatpush2.bf16.msra.mxu0 0
    %1004 = vmatprep.subr.bf16.mxu0 0
    %1005 = vmatpush2.bf16.msra.mxu0 0
    %1006 = vmatprep.subr.bf16.mxu0 0
    %1007 = vmatpush2.bf16.msra.mxu0 0
    %1008 = vmatprep.subr.bf16.mxu0 0
    %1009 = vmatpush2.bf16.msra.mxu0 0
    %1010 = vmatprep.mubr.bf16.mxu0 0
    %1011 = vmatmul.mubr.bf16.gmra.mxu0 %v973
    %v1012 = vpop.f32.mrf.mxu0
    %v1013 = vadd.f32 0.0, %v1012
    %v1014 = vpop.f32.mrf.mxu0
    %v1015 = vpop.f32.mrf.mxu0
    %v1016 = vpop.f32.mrf.mxu0
    %1017 = vdwg.mxu0
    %v1018 = vld [vmem:[%s4 + $0x20] sm:$0xf]
    %v1019 = vld [vmem:[%s4 + $0x28] sm:$0xf]
    %v1020 = vrot.slane %v920, 2
    %v1022 = vsel %vm922, %v1020, 0
    %v1025 = vsel %vm92, %v1019, 0
    %1027 = vmatprep.subr.bf16.mxu0 0
    %1028 = vmatpush1.bf16.msra.mxu0 0
    %1029 = vmatprep.subr.bf16.mxu0 0
    %1030 = vmatpush1.bf16.msra.mxu0 0
    %1031 = vmatprep.subr.bf16.mxu0 0
    %1032 = vmatpush1.bf16.msra.mxu0 0
    %1033 = vmatprep.subr.bf16.mxu0 0
    %1034 = vmatpush1.bf16.msra.mxu0 0
    %1035 = vmatprep.subr.bf16.mxu0 0
    %1036 = vmatpush1.bf16.msra.mxu0 0
    %1037 = vmatprep.subr.bf16.mxu0 0
    %1038 = vmatpush1.bf16.msra.mxu0 0
    %1039 = vmatprep.subr.bf16.mxu0 0
    %1040 = vmatpush1.bf16.msra.mxu0 0
    %1041 = vmatprep.subr.bf16.mxu0 0
    %1042 = vmatpush1.bf16.msra.mxu0 %v1025
    %1043 = vmatprep.subr.bf16.mxu0 0
    %1044 = vmatpush2.bf16.msra.mxu0 0
    %1045 = vmatprep.subr.bf16.mxu0 0
    %1046 = vmatpush2.bf16.msra.mxu0 0
    %1047 = vmatprep.subr.bf16.mxu0 0
    %1048 = vmatpush2.bf16.msra.mxu0 0
    %1049 = vmatprep.subr.bf16.mxu0 0
    %1050 = vmatpush2.bf16.msra.mxu0 0
    %1051 = vmatprep.subr.bf16.mxu0 0
    %1052 = vmatpush2.bf16.msra.mxu0 0
    %1053 = vmatprep.subr.bf16.mxu0 0
    %1054 = vmatpush2.bf16.msra.mxu0 0
    %1055 = vmatprep.subr.bf16.mxu0 0
    %1056 = vmatpush2.bf16.msra.mxu0 0
    %1057 = vmatprep.subr.bf16.mxu0 0
    %1058 = vmatpush2.bf16.msra.mxu0 0
    %1059 = vmatprep.mubr.bf16.mxu0 0
    %1060 = vmatmul.mubr.bf16.gmra.mxu0 %v1022
    %v1061 = vpop.f32.mrf.mxu0
    %v1062 = vadd.f32 0.0, %v1061
    %v1063 = vpop.f32.mrf.mxu0
    %v1064 = vpop.f32.mrf.mxu0
    %v1065 = vpop.f32.mrf.mxu0
    %1066 = vdwg.mxu0
    %v1067 = vld [vmem:[%s4 + $0x30] sm:$0xf]
    %v1068 = vld [vmem:[%s4 + $0x38] sm:$0xf]
    %v1069 = vrot.slane %v920, 3
    %v1071 = vsel %vm922, %v1069, 0
    %v1074 = vsel %vm92, %v1068, 0
    %1076 = vmatprep.subr.bf16.mxu0 0
    %1077 = vmatpush1.bf16.msra.mxu0 0
    %1078 = vmatprep.subr.bf16.mxu0 0
    %1079 = vmatpush1.bf16.msra.mxu0 0
    %1080 = vmatprep.subr.bf16.mxu0 0
    %1081 = vmatpush1.bf16.msra.mxu0 0
    %1082 = vmatprep.subr.bf16.mxu0 0
    %1083 = vmatpush1.bf16.msra.mxu0 0
    %1084 = vmatprep.subr.bf16.mxu0 0
    %1085 = vmatpush1.bf16.msra.mxu0 0
    %1086 = vmatprep.subr.bf16.mxu0 0
    %1087 = vmatpush1.bf16.msra.mxu0 0
    %1088 = vmatprep.subr.bf16.mxu0 0
    %1089 = vmatpush1.bf16.msra.mxu0 0
    %1090 = vmatprep.subr.bf16.mxu0 0
    %1091 = vmatpush1.bf16.msra.mxu0 %v1074
    %1092 = vmatprep.subr.bf16.mxu0 0
    %1093 = vmatpush2.bf16.msra.mxu0 0
    %1094 = vmatprep.subr.bf16.mxu0 0
    %1095 = vmatpush2.bf16.msra.mxu0 0
    %1096 = vmatprep.subr.bf16.mxu0 0
    %1097 = vmatpush2.bf16.msra.mxu0 0
    %1098 = vmatprep.subr.bf16.mxu0 0
    %1099 = vmatpush2.bf16.msra.mxu0 0
    %1100 = vmatprep.subr.bf16.mxu0 0
    %1101 = vmatpush2.bf16.msra.mxu0 0
    %1102 = vmatprep.subr.bf16.mxu0 0
    %1103 = vmatpush2.bf16.msra.mxu0 0
    %1104 = vmatprep.subr.bf16.mxu0 0
    %1105 = vmatpush2.bf16.msra.mxu0 0
    %1106 = vmatprep.subr.bf16.mxu0 0
    %1107 = vmatpush2.bf16.msra.mxu0 0
    %1108 = vmatprep.mubr.bf16.mxu0 0
    %1109 = vmatmul.mubr.bf16.gmra.mxu0 %v1071
    %v1110 = vpop.f32.mrf.mxu0
    %v1111 = vadd.f32 0.0, %v1110
    %v1112 = vpop.f32.mrf.mxu0
    %v1113 = vpop.f32.mrf.mxu0
    %v1114 = vpop.f32.mrf.mxu0
    %1115 = vdwg.mxu0
    %v1116 = vsel %vm922, %v916, 0
    %v1119 = vsel %vm92, %v917, 0
    %1121 = vmatprep.subr.bf16.mxu0 0
    %1122 = vmatpush1.bf16.msra.mxu0 0
    %1123 = vmatprep.subr.bf16.mxu0 0
    %1124 = vmatpush1.bf16.msra.mxu0 0
    %1125 = vmatprep.subr.bf16.mxu0 0
    %1126 = vmatpush1.bf16.msra.mxu0 0
    %1127 = vmatprep.subr.bf16.mxu0 0
    %1128 = vmatpush1.bf16.msra.mxu0 0
    %1129 = vmatprep.subr.bf16.mxu0 0
    %1130 = vmatpush1.bf16.msra.mxu0 0
    %1131 = vmatprep.subr.bf16.mxu0 0
    %1132 = vmatpush1.bf16.msra.mxu0 0
    %1133 = vmatprep.subr.bf16.mxu0 0
    %1134 = vmatpush1.bf16.msra.mxu0 0
    %1135 = vmatprep.subr.bf16.mxu0 0
    %1136 = vmatpush1.bf16.msra.mxu0 %v1119
    %1137 = vmatprep.subr.bf16.mxu0 0
    %1138 = vmatpush2.bf16.msra.mxu0 0
    %1139 = vmatprep.subr.bf16.mxu0 0
    %1140 = vmatpush2.bf16.msra.mxu0 0
    %1141 = vmatprep.subr.bf16.mxu0 0
    %1142 = vmatpush2.bf16.msra.mxu0 0
    %1143 = vmatprep.subr.bf16.mxu0 0
    %1144 = vmatpush2.bf16.msra.mxu0 0
    %1145 = vmatprep.subr.bf16.mxu0 0
    %1146 = vmatpush2.bf16.msra.mxu0 0
    %1147 = vmatprep.subr.bf16.mxu0 0
    %1148 = vmatpush2.bf16.msra.mxu0 0
    %1149 = vmatprep.subr.bf16.mxu0 0
    %1150 = vmatpush2.bf16.msra.mxu0 0
    %1151 = vmatprep.subr.bf16.mxu0 0
    %1152 = vmatpush2.bf16.msra.mxu0 0
    %1153 = vmatprep.mubr.bf16.mxu0 0
    %1154 = vmatmul.mubr.bf16.gmra.mxu0 %v1116
    %v1155 = vpop.f32.mrf.mxu0
    %v1156 = vadd.f32 %v964, %v1155
    %v1157 = vpop.f32.mrf.mxu0
    %v1158 = vpop.f32.mrf.mxu0
    %v1159 = vpop.f32.mrf.mxu0
    %1160 = vdwg.mxu0
    %v1162 = vrot.slane %v916, 1
    %v1164 = vsel %vm922, %v1162, 0
    %v1167 = vsel %vm92, %v969, 0
    %1169 = vmatprep.subr.bf16.mxu0 0
    %1170 = vmatpush1.bf16.msra.mxu0 0
    %1171 = vmatprep.subr.bf16.mxu0 0
    %1172 = vmatpush1.bf16.msra.mxu0 0
    %1173 = vmatprep.subr.bf16.mxu0 0
    %1174 = vmatpush1.bf16.msra.mxu0 0
    %1175 = vmatprep.subr.bf16.mxu0 0
    %1176 = vmatpush1.bf16.msra.mxu0 0
    %1177 = vmatprep.subr.bf16.mxu0 0
    %1178 = vmatpush1.bf16.msra.mxu0 0
    %1179 = vmatprep.subr.bf16.mxu0 0
    %1180 = vmatpush1.bf16.msra.mxu0 0
    %1181 = vmatprep.subr.bf16.mxu0 0
    %1182 = vmatpush1.bf16.msra.mxu0 0
    %1183 = vmatprep.subr.bf16.mxu0 0
    %1184 = vmatpush1.bf16.msra.mxu0 %v1167
    %1185 = vmatprep.subr.bf16.mxu0 0
    %1186 = vmatpush2.bf16.msra.mxu0 0
    %1187 = vmatprep.subr.bf16.mxu0 0
    %1188 = vmatpush2.bf16.msra.mxu0 0
    %1189 = vmatprep.subr.bf16.mxu0 0
    %1190 = vmatpush2.bf16.msra.mxu0 0
    %1191 = vmatprep.subr.bf16.mxu0 0
    %1192 = vmatpush2.bf16.msra.mxu0 0
    %1193 = vmatprep.subr.bf16.mxu0 0
    %1194 = vmatpush2.bf16.msra.mxu0 0
    %1195 = vmatprep.subr.bf16.mxu0 0
    %1196 = vmatpush2.bf16.msra.mxu0 0
    %1197 = vmatprep.subr.bf16.mxu0 0
    %1198 = vmatpush2.bf16.msra.mxu0 0
    %1199 = vmatprep.subr.bf16.mxu0 0
    %1200 = vmatpush2.bf16.msra.mxu0 0
    %1201 = vmatprep.mubr.bf16.mxu0 0
    %1202 = vmatmul.mubr.bf16.gmra.mxu0 %v1164
    %v1203 = vpop.f32.mrf.mxu0
    %v1204 = vadd.f32 %v1013, %v1203
    %v1205 = vpop.f32.mrf.mxu0
    %v1206 = vpop.f32.mrf.mxu0
    %v1207 = vpop.f32.mrf.mxu0
    %1208 = vdwg.mxu0
    %v1209 = vrot.slane %v916, 2
    %v1211 = vsel %vm922, %v1209, 0
    %v1214 = vsel %vm92, %v1018, 0
    %1216 = vmatprep.subr.bf16.mxu0 0
    %1217 = vmatpush1.bf16.msra.mxu0 0
    %1218 = vmatprep.subr.bf16.mxu0 0
    %1219 = vmatpush1.bf16.msra.mxu0 0
    %1220 = vmatprep.subr.bf16.mxu0 0
    %1221 = vmatpush1.bf16.msra.mxu0 0
    %1222 = vmatprep.subr.bf16.mxu0 0
    %1223 = vmatpush1.bf16.msra.mxu0 0
    %1224 = vmatprep.subr.bf16.mxu0 0
    %1225 = vmatpush1.bf16.msra.mxu0 0
    %1226 = vmatprep.subr.bf16.mxu0 0
    %1227 = vmatpush1.bf16.msra.mxu0 0
    %1228 = vmatprep.subr.bf16.mxu0 0
    %1229 = vmatpush1.bf16.msra.mxu0 0
    %1230 = vmatprep.subr.bf16.mxu0 0
    %1231 = vmatpush1.bf16.msra.mxu0 %v1214
    %1232 = vmatprep.subr.bf16.mxu0 0
    %1233 = vmatpush2.bf16.msra.mxu0 0
    %1234 = vmatprep.subr.bf16.mxu0 0
    %1235 = vmatpush2.bf16.msra.mxu0 0
    %1236 = vmatprep.subr.bf16.mxu0 0
    %1237 = vmatpush2.bf16.msra.mxu0 0
    %1238 = vmatprep.subr.bf16.mxu0 0
    %1239 = vmatpush2.bf16.msra.mxu0 0
    %1240 = vmatprep.subr.bf16.mxu0 0
    %1241 = vmatpush2.bf16.msra.mxu0 0
    %1242 = vmatprep.subr.bf16.mxu0 0
    %1243 = vmatpush2.bf16.msra.mxu0 0
    %1244 = vmatprep.subr.bf16.mxu0 0
    %1245 = vmatpush2.bf16.msra.mxu0 0
    %1246 = vmatprep.subr.bf16.mxu0 0
    %1247 = vmatpush2.bf16.msra.mxu0 0
    %1248 = vmatprep.mubr.bf16.mxu0 0
    %1249 = vmatmul.mubr.bf16.gmra.mxu0 %v1211
    %v1250 = vpop.f32.mrf.mxu0
    %v1251 = vadd.f32 %v1062, %v1250
    %v1252 = vpop.f32.mrf.mxu0
    %v1253 = vpop.f32.mrf.mxu0
    %v1254 = vpop.f32.mrf.mxu0
    %1255 = vdwg.mxu0
    %v1256 = vrot.slane %v916, 3
    %v1258 = vsel %vm922, %v1256, 0
    %v1261 = vsel %vm92, %v1067, 0
    %1263 = vmatprep.subr.bf16.mxu0 0
    %1264 = vmatpush1.bf16.msra.mxu0 0
    %1265 = vmatprep.subr.bf16.mxu0 0
    %1266 = vmatpush1.bf16.msra.mxu0 0
    %1267 = vmatprep.subr.bf16.mxu0 0
    %1268 = vmatpush1.bf16.msra.mxu0 0
    %1269 = vmatprep.subr.bf16.mxu0 0
    %1270 = vmatpush1.bf16.msra.mxu0 0
    %1271 = vmatprep.subr.bf16.mxu0 0
    %1272 = vmatpush1.bf16.msra.mxu0 0
    %1273 = vmatprep.subr.bf16.mxu0 0
    %1274 = vmatpush1.bf16.msra.mxu0 0
    %1275 = vmatprep.subr.bf16.mxu0 0
    %1276 = vmatpush1.bf16.msra.mxu0 0
    %1277 = vmatprep.subr.bf16.mxu0 0
    %1278 = vmatpush1.bf16.msra.mxu0 %v1261
    %1279 = vmatprep.subr.bf16.mxu0 0
    %1280 = vmatpush2.bf16.msra.mxu0 0
    %1281 = vmatprep.subr.bf16.mxu0 0
    %1282 = vmatpush2.bf16.msra.mxu0 0
    %1283 = vmatprep.subr.bf16.mxu0 0
    %1284 = vmatpush2.bf16.msra.mxu0 0
    %1285 = vmatprep.subr.bf16.mxu0 0
    %1286 = vmatpush2.bf16.msra.mxu0 0
    %1287 = vmatprep.subr.bf16.mxu0 0
    %1288 = vmatpush2.bf16.msra.mxu0 0
    %1289 = vmatprep.subr.bf16.mxu0 0
    %1290 = vmatpush2.bf16.msra.mxu0 0
    %1291 = vmatprep.subr.bf16.mxu0 0
    %1292 = vmatpush2.bf16.msra.mxu0 0
    %1293 = vmatprep.subr.bf16.mxu0 0
    %1294 = vmatpush2.bf16.msra.mxu0 0
    %1295 = vmatprep.mubr.bf16.mxu0 0
    %1296 = vmatmul.mubr.bf16.gmra.mxu0 %v1258
    %v1297 = vpop.f32.mrf.mxu0
    %v1298 = vadd.f32 %v1111, %v1297
    %v1299 = vpop.f32.mrf.mxu0
    %v1300 = vpop.f32.mrf.mxu0
    %v1301 = vpop.f32.mrf.mxu0
    %1302 = vdwg.mxu0
    %v1303 = vadd.f32 %v1156, %v1204
    %v1304 = vadd.f32 %v1251, %v1298
    %v1305 = vadd.f32 %v1303, %v1304
    %v1306 = vld [vmem:[%s5] sm:$0x1]
    %v1307 = vadd.f32 %v1305, %v1306
    %v1308 = vpack.c.bf16 %v1307, %v1307
    %v1309 = vld [vmem:[%s4] sm:$0xf]
    %v1310 = vld [vmem:[%s4 + $0x8] sm:$0xf]
    %v1311 = vld [vmem:[%s4 + $0x10] sm:$0xf]
    %v1312 = vld [vmem:[%s4 + $0x18] sm:$0xf]
    %v1313 = vld [vmem:[%s4 + $0x20] sm:$0xf]
    %v1314 = vld [vmem:[%s4 + $0x28] sm:$0xf]
    %v1315 = vld [vmem:[%s4 + $0x30] sm:$0xf]
    %v1316 = vld [vmem:[%s5 + $0x8] sm:$0x1]
    %v1325 = vunpack.c.l.b16 %v1309
    %v1326 = vunpack.c.l.b16 %v1310
    %v1327 = vunpack.c.l.b16 %v1311
    %v1328 = vunpack.c.l.b16 %v1312
    %v1329 = vunpack.c.l.b16 %v1313
    %v1330 = vunpack.c.l.b16 %v1314
    %v1331 = vunpack.c.l.b16 %v1315
    %v1332 = vunpack.c.l.b16 %v1068
    %v1333 = vpack.c.b16 %v1326, %v1325
    %v1334 = vpack.c.b16 %v1328, %v1327
    %v1335 = vpack.c.b16 %v1330, %v1329
    %v1336 = vpack.c.b16 %v1332, %v1331
    %1337 = vrot.lane.b32.xlu0 %v1333, 64
    %v1338 = vpop.permute.xlu0 %1337
    %1339 = vrot.lane.b32.xlu0 %v1334, 64
    %v1340 = vpop.permute.xlu0 %1339
    %1341 = vrot.lane.b32.xlu0 %v1335, 64
    %v1342 = vpop.permute.xlu0 %1341
    %1343 = vrot.lane.b32.xlu0 %v1336, 64
    %v1344 = vpop.permute.xlu0 %1343
    %vm1349 = vcmask 523264
    %v1351 = vsel %vm1349, %v1308, 0
    %1353 = vmatprep.subr.bf16.mxu0 0
    %1354 = vmatpush1.bf16.msra.mxu0 0
    %1355 = vmatprep.subr.bf16.mxu0 0
    %1356 = vmatpush1.bf16.msra.mxu0 0
    %1357 = vmatprep.subr.bf16.mxu0 0
    %1358 = vmatpush1.bf16.msra.mxu0 0
    %1359 = vmatprep.subr.bf16.mxu0 0
    %1360 = vmatpush1.bf16.msra.mxu0 0
    %1361 = vmatprep.subr.bf16.mxu0 0
    %1362 = vmatpush1.bf16.msra.mxu0 %v1344
    %1363 = vmatprep.subr.bf16.mxu0 0
    %1364 = vmatpush1.bf16.msra.mxu0 %v1342
    %1365 = vmatprep.subr.bf16.mxu0 0
    %1366 = vmatpush1.bf16.msra.mxu0 %v1340
    %1367 = vmatprep.subr.bf16.mxu0 0
    %1368 = vmatpush1.bf16.msra.mxu0 %v1338
    %1369 = vmatprep.subr.bf16.mxu0 0
    %1370 = vmatpush2.bf16.msra.mxu0 0
    %1371 = vmatprep.subr.bf16.mxu0 0
    %1372 = vmatpush2.bf16.msra.mxu0 0
    %1373 = vmatprep.subr.bf16.mxu0 0
    %1374 = vmatpush2.bf16.msra.mxu0 0
    %1375 = vmatprep.subr.bf16.mxu0 0
    %1376 = vmatpush2.bf16.msra.mxu0 0
    %1377 = vmatprep.subr.bf16.mxu0 0
    %1378 = vmatpush2.bf16.msra.mxu0 0
    %1379 = vmatprep.subr.bf16.mxu0 0
    %1380 = vmatpush2.bf16.msra.mxu0 0
    %1381 = vmatprep.subr.bf16.mxu0 0
    %1382 = vmatpush2.bf16.msra.mxu0 0
    %1383 = vmatprep.subr.bf16.mxu0 0
    %1384 = vmatpush2.bf16.msra.mxu0 0
    %1385 = vmatprep.mubr.bf16.mxu0 0
    %1386 = vmatmul.mubr.bf16.gmra.mxu0 %v1351
    %v1387 = vpop.f32.mrf.mxu0
    %v1388 = vadd.f32 %v1316, %v1387
    %v1389 = vpop.f32.mrf.mxu0
    %v1390 = vpop.f32.mrf.mxu0
    %v1391 = vpop.f32.mrf.mxu0
    %1392 = vdwg.mxu0
    %vm1393 = vcmp.gt.f32.partialorder %v1388, 0.0
    %v1394 = vmin.f32 %v1388, 0.0
    %v1395 = vmul.f32 %v1394, 1.442695
    %v1396 = vpow.pop %v1395
    %v1397 = vsub.f32 %v1396, 1.0
    %v1398 = vsel %vm1393, %v1388, %v1397
    %v1399 = vpack.c.bf16 %v1398, %v1398
    %v1400 = vld [vmem:[%s4 + $0x4] sm:$0xf]
    %v1401 = vld [vmem:[%s4 + $0xc] sm:$0xf]
    %v1402 = vld [vmem:[%s4 + $0x14] sm:$0xf]
    %v1403 = vld [vmem:[%s4 + $0x1c] sm:$0xf]
    %v1404 = vld [vmem:[%s4 + $0x24] sm:$0xf]
    %v1405 = vld [vmem:[%s4 + $0x2c] sm:$0xf]
    %v1406 = vld [vmem:[%s4 + $0x34] sm:$0xf]
    %v1407 = vld [vmem:[%s4 + $0x3c] sm:$0xf]
    %v1408 = vld [vmem:[%s5 + $0x10] sm:$0x1]
    %v1417 = vunpack.c.l.b16 %v1400
    %v1418 = vunpack.c.l.b16 %v1401
    %v1419 = vunpack.c.l.b16 %v1402
    %v1420 = vunpack.c.l.b16 %v1403
    %v1421 = vunpack.c.l.b16 %v1404
    %v1422 = vunpack.c.l.b16 %v1405
    %v1423 = vunpack.c.l.b16 %v1406
    %v1424 = vunpack.c.l.b16 %v1407
    %v1425 = vpack.c.b16 %v1418, %v1417
    %v1426 = vpack.c.b16 %v1420, %v1419
    %v1427 = vpack.c.b16 %v1422, %v1421
    %v1428 = vpack.c.b16 %v1424, %v1423
    %v1434 = vsel %vm1349, %v1399, 0
    %1436 = vmatprep.subr.bf16.mxu0 0
    %1437 = vmatpush1.bf16.msra.mxu0 0
    %1438 = vmatprep.subr.bf16.mxu0 0
    %1439 = vmatpush1.bf16.msra.mxu0 0
    %1440 = vmatprep.subr.bf16.mxu0 0
    %1441 = vmatpush1.bf16.msra.mxu0 0
    %1442 = vmatprep.subr.bf16.mxu0 0
    %1443 = vmatpush1.bf16.msra.mxu0 0
    %1444 = vmatprep.subr.bf16.mxu0 0
    %1445 = vmatpush1.bf16.msra.mxu0 %v1428
    %1446 = vmatprep.subr.bf16.mxu0 0
    %1447 = vmatpush1.bf16.msra.mxu0 %v1427
    %1448 = vmatprep.subr.bf16.mxu0 0
    %1449 = vmatpush1.bf16.msra.mxu0 %v1426
    %1450 = vmatprep.subr.bf16.mxu0 0
    %1451 = vmatpush1.bf16.msra.mxu0 %v1425
    %1452 = vmatprep.subr.bf16.mxu0 0
    %1453 = vmatpush2.bf16.msra.mxu0 0
    %1454 = vmatprep.subr.bf16.mxu0 0
    %1455 = vmatpush2.bf16.msra.mxu0 0
    %1456 = vmatprep.subr.bf16.mxu0 0
    %1457 = vmatpush2.bf16.msra.mxu0 0
    %1458 = vmatprep.subr.bf16.mxu0 0
    %1459 = vmatpush2.bf16.msra.mxu0 0
    %1460 = vmatprep.subr.bf16.mxu0 0
    %1461 = vmatpush2.bf16.msra.mxu0 0
    %1462 = vmatprep.subr.bf16.mxu0 0
    %1463 = vmatpush2.bf16.msra.mxu0 0
    %1464 = vmatprep.subr.bf16.mxu0 0
    %1465 = vmatpush2.bf16.msra.mxu0 0
    %1466 = vmatprep.subr.bf16.mxu0 0
    %1467 = vmatpush2.bf16.msra.mxu0 0
    %1468 = vmatprep.mubr.bf16.mxu0 0
    %1469 = vmatmul.mubr.bf16.gmra.mxu0 %v1434
    %v1470 = vpop.f32.mrf.mxu0
    %v1471 = vadd.f32 %v1408, %v1470
    %v1472 = vpop.f32.mrf.mxu0
    %v1473 = vpop.f32.mrf.mxu0
    %v1474 = vpop.f32.mrf.mxu0
    %1475 = vdwg.mxu0
    %vm1476 = vcmask 57344
    %1477 = vst.msk [vmem:[#allocation2] sm:$0x1] %vm1476, %v1471
    // Predicated region
    $region26: #{tpu_custom_call.1} parent=1 // pred_check
      _
    $region27: #{tpu_custom_call.1} parent=1 // pred_check_branch
      %1479 = sbr.rel (0) target = $region29
    $region28: #{tpu_custom_call.1} parent=1 // pred_region
      %s1481 = ssub.s32 16, 16
      %1482 = vsyncadd [#allocation3], %s1481
      %s1484 = sshll.u32 [#allocation2], 4
      %s1485 = int_to_ptr.vmem [resolvable:$true] %s1484
      %1487 = dma.vmem_to_hbm [thread:$0]  %s1485, 16, %s6, [#allocation3]
    $region29: #{tpu_custom_call.1} parent=1 // pred_fallthru
      _
    // Predicated region
    $region30: #{tpu_custom_call.1} parent=1 // pred_check
      _
    $region31: #{tpu_custom_call.1} parent=1 // pred_check_branch
      %1489 = sbr.rel (0) target = $region33
    $region32: #{tpu_custom_call.1} parent=1 // pred_region
      %1490 = dma.done [#allocation3], 16
    $region33: #{tpu_custom_call.1} parent=1 // pred_fallthru
      _
    %1491 = vsyncpa [#allocation3], 1

</llo_original>
